<compile_context>
chip_gen: v6e
topology: v6e:2x2x1
jax: 0.10.0
libtpu: 0.0.40
codegen_flags: <defaults>
</compile_context>

<pallas_src>
import jax
import jax.numpy as jnp
from jax.experimental import pallas as pl
from jax.experimental.pallas import tpu as pltpu

HIDDEN_SIZE = 768            # roberta-base hidden size
HIDDEN_LAYER_SIZE = 16       # `hidden_layer_size` in the PyTorch file
NUM_LABELS = 3               # num_labels (synthetic)

PAD_HIDDEN = 128             # hidden_layer_size padded to the 128-lane width
PAD_LABELS = 128             # num_labels padded to the 128-lane width


def _head_kernel(x_ref, wp_ref, bp_ref, w1_ref, b1_ref, w2_ref, b2_ref,
                 out_ref):
    # CLS activations for this batch tile: (TM, 768), bf16 (cast in wrapper).
    cls = x_ref[...]

    # RoBERTa pooler: bf16 MXU matmul, f32 accumulate; bias + tanh in f32.
    pooled = jnp.tanh(
        jnp.dot(cls, wp_ref[...], preferred_element_type=jnp.float32)
        + bp_ref[...])

    # dropout (p=0.5) in eval mode == identity
    dropped = pooled

    # base classifier: bf16 [TM, 768] @ bf16 [768, 128(pad)] -> f32, + bias, tanh
    base = jnp.tanh(
        jnp.dot(dropped.astype(jnp.bfloat16), w1_ref[...],
                preferred_element_type=jnp.float32)
        + b1_ref[...])

    # final classifier: [TM, 128(pad)] @ [128, 128(pad)] + [1, 128]
    logits = (jnp.dot(base, w2_ref[...], preferred_element_type=jnp.float32)
              + b2_ref[...])
    out_ref[...] = logits.astype(out_ref.dtype)


def classification_head(last_hidden_state, padded_params, *, tm=512):
    """last_hidden_state: [B, S, 768].  Returns logits [B, NUM_LABELS] (f32)."""
    B, S, H = last_hidden_state.shape
    assert H == HIDDEN_SIZE

    # [CLS] slice in the wrapper (tiny XLA gather) + bf16 cast: the kernel then
    # sees a clean 2-D block and the activation DMA moves half the bytes.
    cls = last_hidden_state[:, 0, :].astype(jnp.bfloat16)

    # Batch tile: up to `tm` (default 512, a 256-multiple for the v6e/v7x MXU),
    # rounded to the bf16 sublane-packing width (16).
    TM = min(tm, pl.cdiv(B, 16) * 16)
    Bp = pl.cdiv(B, TM) * TM
    if Bp != B:
        cls = jnp.pad(cls, ((0, Bp - B), (0, 0)))

    wp = padded_params["wp"]
    bp = padded_params["bp"]
    w1 = padded_params["w1"]
    b1 = padded_params["b1"]
    w2 = padded_params["w2"]
    b2 = padded_params["b2"]

    # Weights/biases stay VMEM-resident across the batch grid (constant index
    # map -> same block every step, no re-DMA).
    resident = lambda arr: pl.BlockSpec(arr.shape, lambda i: (0,) * arr.ndim)

    out = pl.pallas_call(
        _head_kernel,
        out_shape=jax.ShapeDtypeStruct((Bp, PAD_LABELS), jnp.float32),
        grid=(Bp // TM,),
        in_specs=[
            pl.BlockSpec((TM, HIDDEN_SIZE), lambda i: (i, 0)),
            resident(wp), resident(bp),
            resident(w1), resident(b1),
            resident(w2), resident(b2),
        ],
        out_specs=pl.BlockSpec((TM, PAD_LABELS), lambda i: (i, 0)),
        compiler_params=pltpu.CompilerParams(
            dimension_semantics=("parallel",)),
    )(cls, wp, bp, w1, b1, w2, b2)

    return out[:B, :NUM_LABELS]


def init_params(key):
    """Logical (unpadded, f32) parameters, matching the PyTorch module."""
    ks = jax.random.split(key, 6)
    scale = 0.02
    return {
        # RoBERTa pooler: Linear(768, 768)
        "wp": scale * jax.random.normal(ks[0], (HIDDEN_SIZE, HIDDEN_SIZE), jnp.float32),
        "bp": scale * jax.random.normal(ks[1], (1, HIDDEN_SIZE), jnp.float32),
        # _base_layer_classifier: Linear(768, hidden_layer_size)
        "w1": scale * jax.random.normal(ks[2], (HIDDEN_SIZE, HIDDEN_LAYER_SIZE), jnp.float32),
        "b1": scale * jax.random.normal(ks[3], (1, HIDDEN_LAYER_SIZE), jnp.float32),
        # _classifier: Linear(hidden_layer_size, num_labels)
        "w2": scale * jax.random.normal(ks[4], (HIDDEN_LAYER_SIZE, NUM_LABELS), jnp.float32),
        "b2": scale * jax.random.normal(ks[5], (1, NUM_LABELS), jnp.float32),
    }


def prepare_params(p):
    """One-time prep: lane-pad classifier dims to 128; cast the two big
    matmul weights (wp 768x768, w1 768x128) to bf16 (halves their HBM
    traffic; MXU-native)."""
    def pad_to(x, shape):
        return jnp.pad(x, [(0, t - s) for s, t in zip(x.shape, shape)])
    return {
        "wp": p["wp"].astype(jnp.bfloat16),
        "bp": p["bp"],
        "w1": pad_to(p["w1"], (HIDDEN_SIZE, PAD_HIDDEN)).astype(jnp.bfloat16),
        "b1": pad_to(p["b1"], (1, PAD_HIDDEN)),
        "w2": pad_to(p["w2"], (PAD_HIDDEN, PAD_LABELS)),
        "b2": pad_to(p["b2"], (1, PAD_LABELS)),
    }


def reference_head(last_hidden_state, p):
    """Pure-JAX reference with the same numerics (bf16 pooler + w1 matmuls,
    f32 accumulate, f32 bias/tanh)."""
    cls = last_hidden_state[:, 0, :].astype(jnp.bfloat16)
    pooled = jnp.tanh(
        jnp.dot(cls, p["wp"].astype(jnp.bfloat16),
                preferred_element_type=jnp.float32) + p["bp"])
    base = jnp.tanh(
        jnp.dot(pooled.astype(jnp.bfloat16), p["w1"].astype(jnp.bfloat16),
                preferred_element_type=jnp.float32) + p["b1"])
    return base @ p["w2"] + p["b2"]


if __name__ == "__main__":
    key = jax.random.PRNGKey(0)
    k_x, k_p = jax.random.split(key)

    B, S = 2, 8  # small batch / sequence; hidden is fixed at 768 by the module
    last_hidden_state = jax.random.normal(k_x, (B, S, HIDDEN_SIZE), jnp.float32)
    params = init_params(k_p)
    kernel_params = prepare_params(params)

    logits = classification_head(last_hidden_state, kernel_params)
    logits = jax.block_until_ready(logits)

    ref = reference_head(last_hidden_state, params)
    assert logits.shape == (B, NUM_LABELS)
    assert jnp.allclose(logits, ref, atol=2e-4, rtol=2e-4), (
        f"max abs diff {jnp.max(jnp.abs(logits - ref))}")

    print("KERNEL_OK")
</pallas_src>

<mosaic_0001>
module attributes {stable_mosaic.version = 11 : i64} {
  func.func @_head_kernel(%arg0: i32, %arg1: memref<16x768xbf16, #tpu.memory_space<vmem>>, %arg2: memref<768x768xbf16, #tpu.memory_space<vmem>>, %arg3: memref<1x768xf32, #tpu.memory_space<vmem>>, %arg4: memref<768x128xbf16, #tpu.memory_space<vmem>>, %arg5: memref<1x128xf32, #tpu.memory_space<vmem>>, %arg6: memref<128x128xf32, #tpu.memory_space<vmem>>, %arg7: memref<1x128xf32, #tpu.memory_space<vmem>>, %arg8: memref<16x128xf32, #tpu.memory_space<vmem>>) attributes {dimension_semantics = [#tpu.dimension_semantics<parallel>], iteration_bounds = array<i64: 1>, scalar_prefetch = 0 : i64, scratch_operands = 0 : i64, tpu.core_type = #tpu.core_type<tc>, window_params = [{transform_indices = @transform_0, window_bounds = array<i64: 16, 768>}, {pipeline_mode = #tpu.pipeline_mode<synchronous>, transform_indices = @transform_1, window_bounds = array<i64: 768, 768>}, {pipeline_mode = #tpu.pipeline_mode<synchronous>, transform_indices = @transform_2, window_bounds = array<i64: 1, 768>}, {pipeline_mode = #tpu.pipeline_mode<synchronous>, transform_indices = @transform_3, window_bounds = array<i64: 768, 128>}, {pipeline_mode = #tpu.pipeline_mode<synchronous>, transform_indices = @transform_4, window_bounds = array<i64: 1, 128>}, {pipeline_mode = #tpu.pipeline_mode<synchronous>, transform_indices = @transform_5, window_bounds = array<i64: 128, 128>}, {pipeline_mode = #tpu.pipeline_mode<synchronous>, transform_indices = @transform_6, window_bounds = array<i64: 1, 128>}, {transform_indices = @transform_7, window_bounds = array<i64: 16, 128>}]} {
    %c0 = arith.constant 0 : index
    %c0_0 = arith.constant 0 : index
    %0 = vector.load %arg1[%c0, %c0_0] : memref<16x768xbf16, #tpu.memory_space<vmem>>, vector<16x768xbf16>
    %c0_1 = arith.constant 0 : index
    %c0_2 = arith.constant 0 : index
    %1 = vector.load %arg2[%c0_1, %c0_2] : memref<768x768xbf16, #tpu.memory_space<vmem>>, vector<768x768xbf16>
    %cst = arith.constant dense<0.000000e+00> : vector<16x768xf32>
    %2 = tpu.matmul %0, %1, %cst {dimension_numbers = #tpu.dot_dimension_numbers<[1], [0], [0], [1], [0, 0, 1, 1], [], []>} : vector<16x768xbf16>, vector<768x768xbf16>, vector<16x768xf32> -> vector<16x768xf32>
    %c0_3 = arith.constant 0 : index
    %c0_4 = arith.constant 0 : index
    %3 = vector.load %arg3[%c0_3, %c0_4] : memref<1x768xf32, #tpu.memory_space<vmem>>, vector<1x768xf32>
    %4 = vector.broadcast %3 : vector<1x768xf32> to vector<16x768xf32>
    %5 = arith.addf %2, %4 : vector<16x768xf32>
    %6 = math.tanh %5 : vector<16x768xf32>
    %7 = arith.truncf %6 : vector<16x768xf32> to vector<16x768xbf16>
    %c0_5 = arith.constant 0 : index
    %c0_6 = arith.constant 0 : index
    %8 = vector.load %arg4[%c0_5, %c0_6] : memref<768x128xbf16, #tpu.memory_space<vmem>>, vector<768x128xbf16>
    %cst_7 = arith.constant dense<0.000000e+00> : vector<16x128xf32>
    %9 = tpu.matmul %7, %8, %cst_7 {dimension_numbers = #tpu.dot_dimension_numbers<[1], [0], [0], [1], [0, 0, 1, 1], [], []>} : vector<16x768xbf16>, vector<768x128xbf16>, vector<16x128xf32> -> vector<16x128xf32>
    %c0_8 = arith.constant 0 : index
    %c0_9 = arith.constant 0 : index
    %10 = vector.load %arg5[%c0_8, %c0_9] : memref<1x128xf32, #tpu.memory_space<vmem>>, vector<1x128xf32>
    %11 = vector.broadcast %10 : vector<1x128xf32> to vector<16x128xf32>
    %12 = arith.addf %9, %11 : vector<16x128xf32>
    %13 = math.tanh %12 : vector<16x128xf32>
    %c0_10 = arith.constant 0 : index
    %c0_11 = arith.constant 0 : index
    %14 = vector.load %arg6[%c0_10, %c0_11] : memref<128x128xf32, #tpu.memory_space<vmem>>, vector<128x128xf32>
    %cst_12 = arith.constant dense<0.000000e+00> : vector<16x128xf32>
    %15 = tpu.matmul %13, %14, %cst_12 {dimension_numbers = #tpu.dot_dimension_numbers<[1], [0], [0], [1], [0, 0, 1, 1], [], []>} : vector<16x128xf32>, vector<128x128xf32>, vector<16x128xf32> -> vector<16x128xf32>
    %c0_13 = arith.constant 0 : index
    %c0_14 = arith.constant 0 : index
    %16 = vector.load %arg7[%c0_13, %c0_14] : memref<1x128xf32, #tpu.memory_space<vmem>>, vector<1x128xf32>
    %17 = vector.broadcast %16 : vector<1x128xf32> to vector<16x128xf32>
    %18 = arith.addf %15, %17 : vector<16x128xf32>
    %c0_15 = arith.constant 0 : index
    %c0_16 = arith.constant 0 : index
    %19 = vector.load %arg8[%c0_15, %c0_16] : memref<16x128xf32, #tpu.memory_space<vmem>>, vector<16x128xf32>
    tpu.vector_store %arg8[%c0_15, %c0_16], %18 {strides = array<i32>} : memref<16x128xf32, #tpu.memory_space<vmem>>, vector<16x128xf32>,
    return
  }
  func.func @transform_0(%arg0: i32) -> (i32, i32) {
    %c0_i32 = arith.constant 0 : i32
    %c0_i32_0 = arith.constant 0 : i32
    return %arg0, %c0_i32 : i32, i32
  }
  func.func @transform_1(%arg0: i32) -> (i32, i32) {
    %c0_i32 = arith.constant 0 : i32
    %c0_i32_0 = arith.constant 0 : i32
    %c0_i32_1 = arith.constant 0 : i32
    return %c0_i32, %c0_i32_0 : i32, i32
  }
  func.func @transform_2(%arg0: i32) -> (i32, i32) {
    %c0_i32 = arith.constant 0 : i32
    %c0_i32_0 = arith.constant 0 : i32
    %c0_i32_1 = arith.constant 0 : i32
    return %c0_i32, %c0_i32_0 : i32, i32
  }
  func.func @transform_3(%arg0: i32) -> (i32, i32) {
    %c0_i32 = arith.constant 0 : i32
    %c0_i32_0 = arith.constant 0 : i32
    %c0_i32_1 = arith.constant 0 : i32
    return %c0_i32, %c0_i32_0 : i32, i32
  }
  func.func @transform_4(%arg0: i32) -> (i32, i32) {
    %c0_i32 = arith.constant 0 : i32
    %c0_i32_0 = arith.constant 0 : i32
    %c0_i32_1 = arith.constant 0 : i32
    return %c0_i32, %c0_i32_0 : i32, i32
  }
  func.func @transform_5(%arg0: i32) -> (i32, i32) {
    %c0_i32 = arith.constant 0 : i32
    %c0_i32_0 = arith.constant 0 : i32
    %c0_i32_1 = arith.constant 0 : i32
    return %c0_i32, %c0_i32_0 : i32, i32
  }
  func.func @transform_6(%arg0: i32) -> (i32, i32) {
    %c0_i32 = arith.constant 0 : i32
    %c0_i32_0 = arith.constant 0 : i32
    %c0_i32_1 = arith.constant 0 : i32
    return %c0_i32, %c0_i32_0 : i32, i32
  }
  func.func @transform_7(%arg0: i32) -> (i32, i32) {
    %c0_i32 = arith.constant 0 : i32
    %c0_i32_0 = arith.constant 0 : i32
    return %arg0, %c0_i32 : i32, i32
  }
}

</mosaic_0001>

<llo_original>
// kernel: tpu_custom_call.1
$region0: #{tpu_custom_call.1}
  #allocation0 [shape = 'u32[]', space=smem, size = 0x4, offset = 0x4, fixed_abs, tag = 'smem constant byte address 0x4 - core index']
  #allocation1 [shape = 'u32[144,128]{1,0:T(1,128)}', space=vmem, size = 0x12000, scoped, tag = 'internal scratch']
  %s0 = inlined_call_operand.hbm [shape: bf16[16,768], index: 0, kind: input, shape index: {}]
  %s1 = inlined_call_operand.hbm [shape: bf16[768,768], index: 1, kind: input, shape index: {}]
  %s2 = inlined_call_operand.hbm [shape: f32[1,768], index: 2, kind: input, shape index: {}]
  %s3 = inlined_call_operand.hbm [shape: bf16[768,128], index: 3, kind: input, shape index: {}]
  %s4 = inlined_call_operand.hbm [shape: f32[1,128], index: 4, kind: input, shape index: {}]
  %s5 = inlined_call_operand.hbm [shape: f32[128,128], index: 5, kind: input, shape index: {}]
  %s6 = inlined_call_operand.hbm [shape: f32[1,128], index: 6, kind: input, shape index: {}]
  %s7 = inlined_call_operand.hbm [shape: f32[16,128], index: 7, kind: output, shape index: {}]
  %s8 = sld [smem:[#allocation0]]
  $region66: #{tpu_custom_call.1} parent=0
    _
  %s10 = ssub.s32 1, %s8
  %s11 = scalar_select 0, %s10, %s8
  $region1: #{tpu_custom_call.1} parent=0
    #allocation2 [shape = 'u8[24576]{0}', space=vmem, size = 0x6000, scoped, tag = 'input window, operand 0, single buffered']
    #allocation3 [shape = 's32[1]{0}', space=sflag, size = 0x4, scoped, tag = 'scoped memory for tpu_custom_call.1']
    #allocation4 [shape = 's32[1]{0}', space=sflag, size = 0x4, scoped, tag = 'scoped memory for tpu_custom_call.1']
    #allocation5 [shape = 'u8[1179648]{0}', space=vmem, size = 0x120000, scoped, tag = 'input window, operand 1, single buffered']
    #allocation6 [shape = 's32[1]{0}', space=sflag, size = 0x4, scoped, tag = 'scoped memory for tpu_custom_call.1']
    #allocation7 [shape = 'u8[3072]{0}', space=vmem, size = 0xc00, scoped, tag = 'input window, operand 2, single buffered']
    #allocation8 [shape = 'u8[196608]{0}', space=vmem, size = 0x30000, scoped, tag = 'input window, operand 3, single buffered']
    #allocation9 [shape = 's32[1]{0}', space=sflag, size = 0x4, scoped, tag = 'scoped memory for tpu_custom_call.1']
    #allocation10 [shape = 'u8[512]{0}', space=vmem, size = 0x400, scoped, tag = 'input window, operand 4, single buffered']
    #allocation11 [shape = 'u8[65536]{0}', space=vmem, size = 0x10000, scoped, tag = 'input window, operand 5, single buffered']
    #allocation12 [shape = 's32[1]{0}', space=sflag, size = 0x4, scoped, tag = 'scoped memory for tpu_custom_call.1']
    #allocation13 [shape = 'u8[512]{0}', space=vmem, size = 0x400, scoped, tag = 'input window, operand 6, single buffered']
    #allocation14 [shape = 'u8[8192]{0}', space=vmem, size = 0x2000, scoped, tag = 'output window, operand 0, single buffered']
    %12 = vsyncpa [#allocation3], 0
    %13 = vsyncpa [#allocation6], 0
    %14 = vsyncpa [#allocation9], 0
    %15 = vsyncpa [#allocation12], 0
    %16 = vsyncpa [#allocation4], 0
    // Predicated region
    $region2: #{tpu_custom_call.1} parent=1 // pred_check
      _
    $region3: #{tpu_custom_call.1} parent=1 // pred_check_branch
      %18 = sbr.rel (0) target = $region5
    $region4: #{tpu_custom_call.1} parent=1 // pred_region
      %s20 = ssub.s32 768, 768
      %21 = vsyncadd [#allocation3], %s20
      %s22 = sshll.u32 [#allocation2], 4
      %s23 = int_to_ptr.vmem [resolvable:$true] %s22
      %28 = dma.hbm_to_vmem [thread:$0]  %s0, 768, %s23, [#allocation3], 384, 384, 24
    $region5: #{tpu_custom_call.1} parent=1 // pred_fallthru
      _
    // Predicated region
    $region6: #{tpu_custom_call.1} parent=1 // pred_check
      _
    $region7: #{tpu_custom_call.1} parent=1 // pred_check_branch
      %30 = sbr.rel (0) target = $region9
    $region8: #{tpu_custom_call.1} parent=1 // pred_region
      %s32 = ssub.s32 36864, 36864
      %33 = vsyncadd [#allocation6], %s32
      %s34 = sshll.u32 [#allocation5], 4
      %s35 = int_to_ptr.vmem [resolvable:$true] %s34
      %40 = dma.hbm_to_vmem [thread:$0]  %s1, 36864, %s35, [#allocation6], 384, 384, 24
    $region9: #{tpu_custom_call.1} parent=1 // pred_fallthru
      _
    // Predicated region
    $region10: #{tpu_custom_call.1} parent=1 // pred_check
      _
    $region11: #{tpu_custom_call.1} parent=1 // pred_check_branch
      %42 = sbr.rel (0) target = $region13
    $region12: #{tpu_custom_call.1} parent=1 // pred_region
      %s44 = ssub.s32 96, 96
      %45 = vsyncadd [#allocation6], %s44
      %s47 = sshll.u32 [#allocation7], 4
      %s48 = int_to_ptr.vmem [resolvable:$true] %s47
      %50 = dma.hbm_to_vmem [thread:$0]  %s2, 96, %s48, [#allocation6]
    $region13: #{tpu_custom_call.1} parent=1 // pred_fallthru
      _
    // Predicated region
    $region14: #{tpu_custom_call.1} parent=1 // pred_check
      _
    $region15: #{tpu_custom_call.1} parent=1 // pred_check_branch
      %52 = sbr.rel (0) target = $region17
    $region16: #{tpu_custom_call.1} parent=1 // pred_region
      %s54 = ssub.s32 6144, 6144
      %55 = vsyncadd [#allocation9], %s54
      %s56 = sshll.u32 [#allocation8], 4
      %s57 = int_to_ptr.vmem [resolvable:$true] %s56
      %62 = dma.hbm_to_vmem [thread:$0]  %s3, 6144, %s57, [#allocation9], 64, 64, 4
    $region17: #{tpu_custom_call.1} parent=1 // pred_fallthru
      _
    // Predicated region
    $region18: #{tpu_custom_call.1} parent=1 // pred_check
      _
    $region19: #{tpu_custom_call.1} parent=1 // pred_check_branch
      %64 = sbr.rel (0) target = $region21
    $region20: #{tpu_custom_call.1} parent=1 // pred_region
      %s66 = ssub.s32 16, 16
      %67 = vsyncadd [#allocation9], %s66
      %s69 = sshll.u32 [#allocation10], 4
      %s70 = int_to_ptr.vmem [resolvable:$true] %s69
      %72 = dma.hbm_to_vmem [thread:$0]  %s4, 16, %s70, [#allocation9]
    $region21: #{tpu_custom_call.1} parent=1 // pred_fallthru
      _
    // Predicated region
    $region22: #{tpu_custom_call.1} parent=1 // pred_check
      _
    $region23: #{tpu_custom_call.1} parent=1 // pred_check_branch
      %74 = sbr.rel (0) target = $region25
    $region24: #{tpu_custom_call.1} parent=1 // pred_region
      %s76 = ssub.s32 2048, 2048
      %77 = vsyncadd [#allocation12], %s76
      %s78 = sshll.u32 [#allocation11], 4
      %s79 = int_to_ptr.vmem [resolvable:$true] %s78
      %84 = dma.hbm_to_vmem [thread:$0]  %s5, 2048, %s79, [#allocation12], 128, 128, 8
    $region25: #{tpu_custom_call.1} parent=1 // pred_fallthru
      _
    // Predicated region
    $region26: #{tpu_custom_call.1} parent=1 // pred_check
      _
    $region27: #{tpu_custom_call.1} parent=1 // pred_check_branch
      %86 = sbr.rel (0) target = $region29
    $region28: #{tpu_custom_call.1} parent=1 // pred_region
      %s88 = ssub.s32 16, 16
      %89 = vsyncadd [#allocation12], %s88
      %s91 = sshll.u32 [#allocation13], 4
      %s92 = int_to_ptr.vmem [resolvable:$true] %s91
      %94 = dma.hbm_to_vmem [thread:$0]  %s6, 16, %s92, [#allocation12]
    $region29: #{tpu_custom_call.1} parent=1 // pred_fallthru
      _
    // Predicated region
    $region30: #{tpu_custom_call.1} parent=1 // pred_check
      _
    $region31: #{tpu_custom_call.1} parent=1 // pred_check_branch
      %96 = sbr.rel (0) target = $region33
    $region32: #{tpu_custom_call.1} parent=1 // pred_region
      %97 = dma.done [#allocation3], 768
    $region33: #{tpu_custom_call.1} parent=1 // pred_fallthru
      _
    // Predicated region
    $region34: #{tpu_custom_call.1} parent=1 // pred_check
      _
    $region35: #{tpu_custom_call.1} parent=1 // pred_check_branch
      %99 = sbr.rel (0) target = $region37
    $region36: #{tpu_custom_call.1} parent=1 // pred_region
      %100 = dma.done [#allocation6], 36864
    $region37: #{tpu_custom_call.1} parent=1 // pred_fallthru
      _
    // Predicated region
    $region38: #{tpu_custom_call.1} parent=1 // pred_check
      _
    $region39: #{tpu_custom_call.1} parent=1 // pred_check_branch
      %102 = sbr.rel (0) target = $region41
    $region40: #{tpu_custom_call.1} parent=1 // pred_region
      %103 = dma.done [#allocation6], 96
    $region41: #{tpu_custom_call.1} parent=1 // pred_fallthru
      _
    // Predicated region
    $region42: #{tpu_custom_call.1} parent=1 // pred_check
      _
    $region43: #{tpu_custom_call.1} parent=1 // pred_check_branch
      %105 = sbr.rel (0) target = $region45
    $region44: #{tpu_custom_call.1} parent=1 // pred_region
      %106 = dma.done [#allocation9], 6144
    $region45: #{tpu_custom_call.1} parent=1 // pred_fallthru
      _
    // Predicated region
    $region46: #{tpu_custom_call.1} parent=1 // pred_check
      _
    $region47: #{tpu_custom_call.1} parent=1 // pred_check_branch
      %108 = sbr.rel (0) target = $region49
    $region48: #{tpu_custom_call.1} parent=1 // pred_region
      %109 = dma.done [#allocation9], 16
    $region49: #{tpu_custom_call.1} parent=1 // pred_fallthru
      _
    // Predicated region
    $region50: #{tpu_custom_call.1} parent=1 // pred_check
      _
    $region51: #{tpu_custom_call.1} parent=1 // pred_check_branch
      %111 = sbr.rel (0) target = $region53
    $region52: #{tpu_custom_call.1} parent=1 // pred_region
      %112 = dma.done [#allocation12], 2048
    $region53: #{tpu_custom_call.1} parent=1 // pred_fallthru
      _
    // Predicated region
    $region54: #{tpu_custom_call.1} parent=1 // pred_check
      _
    $region55: #{tpu_custom_call.1} parent=1 // pred_check_branch
      %114 = sbr.rel (0) target = $region57
    $region56: #{tpu_custom_call.1} parent=1 // pred_region
      %115 = dma.done [#allocation12], 16
    $region57: #{tpu_custom_call.1} parent=1 // pred_fallthru
      _
    %v117 = vld [vmem:[#allocation2] sm:$0xff]
    %v118 = vld [vmem:[#allocation2 + $0x8] sm:$0xff]
    %v119 = vld [vmem:[#allocation2 + $0x10] sm:$0xff]
    %v120 = vld [vmem:[#allocation2 + $0x18] sm:$0xff]
    %v121 = vld [vmem:[#allocation2 + $0x20] sm:$0xff]
    %v122 = vld [vmem:[#allocation2 + $0x28] sm:$0xff]
    %v123 = vld [vmem:[#allocation5] sm:$0xff]
    %v124 = vld [vmem:[#allocation5 + $0x8] sm:$0xff]
    %v125 = vld [vmem:[#allocation5 + $0x10] sm:$0xff]
    %v126 = vld [vmem:[#allocation5 + $0x18] sm:$0xff]
    %v127 = vld [vmem:[#allocation5 + $0x20] sm:$0xff]
    %v128 = vld [vmem:[#allocation5 + $0x28] sm:$0xff]
    %v129 = vld [vmem:[#allocation5 + $0x30] sm:$0xff]
    %v130 = vld [vmem:[#allocation5 + $0x38] sm:$0xff]
    %v131 = vld [vmem:[#allocation5 + $0x40] sm:$0xff]
    %v132 = vld [vmem:[#allocation5 + $0x48] sm:$0xff]
    %v133 = vld [vmem:[#allocation5 + $0x50] sm:$0xff]
    %v134 = vld [vmem:[#allocation5 + $0x58] sm:$0xff]
    %v135 = vld [vmem:[#allocation5 + $0x60] sm:$0xff]
    %v136 = vld [vmem:[#allocation5 + $0x68] sm:$0xff]
    %v137 = vld [vmem:[#allocation5 + $0x70] sm:$0xff]
    %v138 = vld [vmem:[#allocation5 + $0x78] sm:$0xff]
    %v139 = vld [vmem:[#allocation5 + $0x80] sm:$0xff]
    %v140 = vld [vmem:[#allocation5 + $0x88] sm:$0xff]
    %v141 = vld [vmem:[#allocation5 + $0x90] sm:$0xff]
    %v142 = vld [vmem:[#allocation5 + $0x98] sm:$0xff]
    %v143 = vld [vmem:[#allocation5 + $0xa0] sm:$0xff]
    %v144 = vld [vmem:[#allocation5 + $0xa8] sm:$0xff]
    %v145 = vld [vmem:[#allocation5 + $0xb0] sm:$0xff]
    %v146 = vld [vmem:[#allocation5 + $0xb8] sm:$0xff]
    %v147 = vld [vmem:[#allocation5 + $0xc0] sm:$0xff]
    %v148 = vld [vmem:[#allocation5 + $0xc8] sm:$0xff]
    %v149 = vld [vmem:[#allocation5 + $0xd0] sm:$0xff]
    %v150 = vld [vmem:[#allocation5 + $0xd8] sm:$0xff]
    %v151 = vld [vmem:[#allocation5 + $0xe0] sm:$0xff]
    %v152 = vld [vmem:[#allocation5 + $0xe8] sm:$0xff]
    %v153 = vld [vmem:[#allocation5 + $0xf0] sm:$0xff]
    %v154 = vld [vmem:[#allocation5 + $0xf8] sm:$0xff]
    %v155 = vld [vmem:[#allocation5 + $0x100] sm:$0xff]
    %v156 = vld [vmem:[#allocation5 + $0x108] sm:$0xff]
    %v157 = vld [vmem:[#allocation5 + $0x110] sm:$0xff]
    %v158 = vld [vmem:[#allocation5 + $0x118] sm:$0xff]
    %v159 = vld [vmem:[#allocation5 + $0x120] sm:$0xff]
    %v160 = vld [vmem:[#allocation5 + $0x128] sm:$0xff]
    %v161 = vld [vmem:[#allocation5 + $0x130] sm:$0xff]
    %v162 = vld [vmem:[#allocation5 + $0x138] sm:$0xff]
    %v163 = vld [vmem:[#allocation5 + $0x140] sm:$0xff]
    %v164 = vld [vmem:[#allocation5 + $0x148] sm:$0xff]
    %v165 = vld [vmem:[#allocation5 + $0x150] sm:$0xff]
    %v166 = vld [vmem:[#allocation5 + $0x158] sm:$0xff]
    %v167 = vld [vmem:[#allocation5 + $0x160] sm:$0xff]
    %v168 = vld [vmem:[#allocation5 + $0x168] sm:$0xff]
    %v169 = vld [vmem:[#allocation5 + $0x170] sm:$0xff]
    %v170 = vld [vmem:[#allocation5 + $0x178] sm:$0xff]
    %v171 = vld [vmem:[#allocation5 + $0x180] sm:$0xff]
    %v172 = vld [vmem:[#allocation5 + $0x188] sm:$0xff]
    %v173 = vld [vmem:[#allocation5 + $0x190] sm:$0xff]
    %v174 = vld [vmem:[#allocation5 + $0x198] sm:$0xff]
    %v175 = vld [vmem:[#allocation5 + $0x1a0] sm:$0xff]
    %v176 = vld [vmem:[#allocation5 + $0x1a8] sm:$0xff]
    %v177 = vld [vmem:[#allocation5 + $0x1b0] sm:$0xff]
    %v178 = vld [vmem:[#allocation5 + $0x1b8] sm:$0xff]
    %v179 = vld [vmem:[#allocation5 + $0x1c0] sm:$0xff]
    %v180 = vld [vmem:[#allocation5 + $0x1c8] sm:$0xff]
    %v181 = vld [vmem:[#allocation5 + $0x1d0] sm:$0xff]
    %v182 = vld [vmem:[#allocation5 + $0x1d8] sm:$0xff]
    %v183 = vld [vmem:[#allocation5 + $0x1e0] sm:$0xff]
    %v184 = vld [vmem:[#allocation5 + $0x1e8] sm:$0xff]
    %v185 = vld [vmem:[#allocation5 + $0x1f0] sm:$0xff]
    %v186 = vld [vmem:[#allocation5 + $0x1f8] sm:$0xff]
    %v187 = vld [vmem:[#allocation5 + $0x200] sm:$0xff]
    %v188 = vld [vmem:[#allocation5 + $0x208] sm:$0xff]
    %v189 = vld [vmem:[#allocation5 + $0x210] sm:$0xff]
    %v190 = vld [vmem:[#allocation5 + $0x218] sm:$0xff]
    %v191 = vld [vmem:[#allocation5 + $0x220] sm:$0xff]
    %v192 = vld [vmem:[#allocation5 + $0x228] sm:$0xff]
    %v193 = vld [vmem:[#allocation5 + $0x230] sm:$0xff]
    %v194 = vld [vmem:[#allocation5 + $0x238] sm:$0xff]
    %v195 = vld [vmem:[#allocation5 + $0x240] sm:$0xff]
    %v196 = vld [vmem:[#allocation5 + $0x248] sm:$0xff]
    %v197 = vld [vmem:[#allocation5 + $0x250] sm:$0xff]
    %v198 = vld [vmem:[#allocation5 + $0x258] sm:$0xff]
    %v199 = vld [vmem:[#allocation5 + $0x260] sm:$0xff]
    %v200 = vld [vmem:[#allocation5 + $0x268] sm:$0xff]
    %v201 = vld [vmem:[#allocation5 + $0x270] sm:$0xff]
    %v202 = vld [vmem:[#allocation5 + $0x278] sm:$0xff]
    %v203 = vld [vmem:[#allocation5 + $0x280] sm:$0xff]
    %v204 = vld [vmem:[#allocation5 + $0x288] sm:$0xff]
    %v205 = vld [vmem:[#allocation5 + $0x290] sm:$0xff]
    %v206 = vld [vmem:[#allocation5 + $0x298] sm:$0xff]
    %v207 = vld [vmem:[#allocation5 + $0x2a0] sm:$0xff]
    %v208 = vld [vmem:[#allocation5 + $0x2a8] sm:$0xff]
    %v209 = vld [vmem:[#allocation5 + $0x2b0] sm:$0xff]
    %v210 = vld [vmem:[#allocation5 + $0x2b8] sm:$0xff]
    %v211 = vld [vmem:[#allocation5 + $0x2c0] sm:$0xff]
    %v212 = vld [vmem:[#allocation5 + $0x2c8] sm:$0xff]
    %v213 = vld [vmem:[#allocation5 + $0x2d0] sm:$0xff]
    %v214 = vld [vmem:[#allocation5 + $0x2d8] sm:$0xff]
    %v215 = vld [vmem:[#allocation5 + $0x2e0] sm:$0xff]
    %v216 = vld [vmem:[#allocation5 + $0x2e8] sm:$0xff]
    %v217 = vld [vmem:[#allocation5 + $0x2f0] sm:$0xff]
    %v218 = vld [vmem:[#allocation5 + $0x2f8] sm:$0xff]
    %v219 = vld [vmem:[#allocation5 + $0x300] sm:$0xff]
    %v220 = vld [vmem:[#allocation5 + $0x308] sm:$0xff]
    %v221 = vld [vmem:[#allocation5 + $0x310] sm:$0xff]
    %v222 = vld [vmem:[#allocation5 + $0x318] sm:$0xff]
    %v223 = vld [vmem:[#allocation5 + $0x320] sm:$0xff]
    %v224 = vld [vmem:[#allocation5 + $0x328] sm:$0xff]
    %v225 = vld [vmem:[#allocation5 + $0x330] sm:$0xff]
    %v226 = vld [vmem:[#allocation5 + $0x338] sm:$0xff]
    %v227 = vld [vmem:[#allocation5 + $0x340] sm:$0xff]
    %v228 = vld [vmem:[#allocation5 + $0x348] sm:$0xff]
    %v229 = vld [vmem:[#allocation5 + $0x350] sm:$0xff]
    %v230 = vld [vmem:[#allocation5 + $0x358] sm:$0xff]
    %v231 = vld [vmem:[#allocation5 + $0x360] sm:$0xff]
    %v232 = vld [vmem:[#allocation5 + $0x368] sm:$0xff]
    %v233 = vld [vmem:[#allocation5 + $0x370] sm:$0xff]
    %v234 = vld [vmem:[#allocation5 + $0x378] sm:$0xff]
    %v235 = vld [vmem:[#allocation5 + $0x380] sm:$0xff]
    %v236 = vld [vmem:[#allocation5 + $0x388] sm:$0xff]
    %v237 = vld [vmem:[#allocation5 + $0x390] sm:$0xff]
    %v238 = vld [vmem:[#allocation5 + $0x398] sm:$0xff]
    %v239 = vld [vmem:[#allocation5 + $0x3a0] sm:$0xff]
    %v240 = vld [vmem:[#allocation5 + $0x3a8] sm:$0xff]
    %v241 = vld [vmem:[#allocation5 + $0x3b0] sm:$0xff]
    %v242 = vld [vmem:[#allocation5 + $0x3b8] sm:$0xff]
    %v243 = vld [vmem:[#allocation5 + $0x3c0] sm:$0xff]
    %v244 = vld [vmem:[#allocation5 + $0x3c8] sm:$0xff]
    %v245 = vld [vmem:[#allocation5 + $0x3d0] sm:$0xff]
    %v246 = vld [vmem:[#allocation5 + $0x3d8] sm:$0xff]
    %v247 = vld [vmem:[#allocation5 + $0x3e0] sm:$0xff]
    %v248 = vld [vmem:[#allocation5 + $0x3e8] sm:$0xff]
    %v249 = vld [vmem:[#allocation5 + $0x3f0] sm:$0xff]
    %v250 = vld [vmem:[#allocation5 + $0x3f8] sm:$0xff]
    %v251 = vld [vmem:[#allocation5 + $0x400] sm:$0xff]
    %v252 = vld [vmem:[#allocation5 + $0x408] sm:$0xff]
    %v253 = vld [vmem:[#allocation5 + $0x410] sm:$0xff]
    %v254 = vld [vmem:[#allocation5 + $0x418] sm:$0xff]
    %v255 = vld [vmem:[#allocation5 + $0x420] sm:$0xff]
    %v256 = vld [vmem:[#allocation5 + $0x428] sm:$0xff]
    %v257 = vld [vmem:[#allocation5 + $0x430] sm:$0xff]
    %v258 = vld [vmem:[#allocation5 + $0x438] sm:$0xff]
    %v259 = vld [vmem:[#allocation5 + $0x440] sm:$0xff]
    %v260 = vld [vmem:[#allocation5 + $0x448] sm:$0xff]
    %v261 = vld [vmem:[#allocation5 + $0x450] sm:$0xff]
    %v262 = vld [vmem:[#allocation5 + $0x458] sm:$0xff]
    %v263 = vld [vmem:[#allocation5 + $0x460] sm:$0xff]
    %v264 = vld [vmem:[#allocation5 + $0x468] sm:$0xff]
    %v265 = vld [vmem:[#allocation5 + $0x470] sm:$0xff]
    %v266 = vld [vmem:[#allocation5 + $0x478] sm:$0xff]
    %v267 = vld [vmem:[#allocation5 + $0x480] sm:$0xff]
    %v268 = vld [vmem:[#allocation5 + $0x488] sm:$0xff]
    %v269 = vld [vmem:[#allocation5 + $0x490] sm:$0xff]
    %v270 = vld [vmem:[#allocation5 + $0x498] sm:$0xff]
    %v271 = vld [vmem:[#allocation5 + $0x4a0] sm:$0xff]
    %v272 = vld [vmem:[#allocation5 + $0x4a8] sm:$0xff]
    %v273 = vld [vmem:[#allocation5 + $0x4b0] sm:$0xff]
    %v274 = vld [vmem:[#allocation5 + $0x4b8] sm:$0xff]
    %v275 = vld [vmem:[#allocation5 + $0x4c0] sm:$0xff]
    %v276 = vld [vmem:[#allocation5 + $0x4c8] sm:$0xff]
    %v277 = vld [vmem:[#allocation5 + $0x4d0] sm:$0xff]
    %v278 = vld [vmem:[#allocation5 + $0x4d8] sm:$0xff]
    %v279 = vld [vmem:[#allocation5 + $0x4e0] sm:$0xff]
    %v280 = vld [vmem:[#allocation5 + $0x4e8] sm:$0xff]
    %v281 = vld [vmem:[#allocation5 + $0x4f0] sm:$0xff]
    %v282 = vld [vmem:[#allocation5 + $0x4f8] sm:$0xff]
    %v283 = vld [vmem:[#allocation5 + $0x500] sm:$0xff]
    %v284 = vld [vmem:[#allocation5 + $0x508] sm:$0xff]
    %v285 = vld [vmem:[#allocation5 + $0x510] sm:$0xff]
    %v286 = vld [vmem:[#allocation5 + $0x518] sm:$0xff]
    %v287 = vld [vmem:[#allocation5 + $0x520] sm:$0xff]
    %v288 = vld [vmem:[#allocation5 + $0x528] sm:$0xff]
    %v289 = vld [vmem:[#allocation5 + $0x530] sm:$0xff]
    %v290 = vld [vmem:[#allocation5 + $0x538] sm:$0xff]
    %v291 = vld [vmem:[#allocation5 + $0x540] sm:$0xff]
    %v292 = vld [vmem:[#allocation5 + $0x548] sm:$0xff]
    %v293 = vld [vmem:[#allocation5 + $0x550] sm:$0xff]
    %v294 = vld [vmem:[#allocation5 + $0x558] sm:$0xff]
    %v295 = vld [vmem:[#allocation5 + $0x560] sm:$0xff]
    %v296 = vld [vmem:[#allocation5 + $0x568] sm:$0xff]
    %v297 = vld [vmem:[#allocation5 + $0x570] sm:$0xff]
    %v298 = vld [vmem:[#allocation5 + $0x578] sm:$0xff]
    %v299 = vld [vmem:[#allocation5 + $0x580] sm:$0xff]
    %v300 = vld [vmem:[#allocation5 + $0x588] sm:$0xff]
    %v301 = vld [vmem:[#allocation5 + $0x590] sm:$0xff]
    %v302 = vld [vmem:[#allocation5 + $0x598] sm:$0xff]
    %v303 = vld [vmem:[#allocation5 + $0x5a0] sm:$0xff]
    %v304 = vld [vmem:[#allocation5 + $0x5a8] sm:$0xff]
    %v305 = vld [vmem:[#allocation5 + $0x5b0] sm:$0xff]
    %v306 = vld [vmem:[#allocation5 + $0x5b8] sm:$0xff]
    %v307 = vld [vmem:[#allocation5 + $0x5c0] sm:$0xff]
    %v308 = vld [vmem:[#allocation5 + $0x5c8] sm:$0xff]
    %v309 = vld [vmem:[#allocation5 + $0x5d0] sm:$0xff]
    %v310 = vld [vmem:[#allocation5 + $0x5d8] sm:$0xff]
    %v311 = vld [vmem:[#allocation5 + $0x5e0] sm:$0xff]
    %v312 = vld [vmem:[#allocation5 + $0x5e8] sm:$0xff]
    %v313 = vld [vmem:[#allocation5 + $0x5f0] sm:$0xff]
    %v314 = vld [vmem:[#allocation5 + $0x5f8] sm:$0xff]
    %v315 = vld [vmem:[#allocation5 + $0x600] sm:$0xff]
    %v316 = vld [vmem:[#allocation5 + $0x608] sm:$0xff]
    %v317 = vld [vmem:[#allocation5 + $0x610] sm:$0xff]
    %v318 = vld [vmem:[#allocation5 + $0x618] sm:$0xff]
    %v319 = vld [vmem:[#allocation5 + $0x620] sm:$0xff]
    %v320 = vld [vmem:[#allocation5 + $0x628] sm:$0xff]
    %v321 = vld [vmem:[#allocation5 + $0x630] sm:$0xff]
    %v322 = vld [vmem:[#allocation5 + $0x638] sm:$0xff]
    %v323 = vld [vmem:[#allocation5 + $0x640] sm:$0xff]
    %v324 = vld [vmem:[#allocation5 + $0x648] sm:$0xff]
    %v325 = vld [vmem:[#allocation5 + $0x650] sm:$0xff]
    %v326 = vld [vmem:[#allocation5 + $0x658] sm:$0xff]
    %v327 = vld [vmem:[#allocation5 + $0x660] sm:$0xff]
    %v328 = vld [vmem:[#allocation5 + $0x668] sm:$0xff]
    %v329 = vld [vmem:[#allocation5 + $0x670] sm:$0xff]
    %v330 = vld [vmem:[#allocation5 + $0x678] sm:$0xff]
    %v331 = vld [vmem:[#allocation5 + $0x680] sm:$0xff]
    %v332 = vld [vmem:[#allocation5 + $0x688] sm:$0xff]
    %v333 = vld [vmem:[#allocation5 + $0x690] sm:$0xff]
    %v334 = vld [vmem:[#allocation5 + $0x698] sm:$0xff]
    %v335 = vld [vmem:[#allocation5 + $0x6a0] sm:$0xff]
    %v336 = vld [vmem:[#allocation5 + $0x6a8] sm:$0xff]
    %v337 = vld [vmem:[#allocation5 + $0x6b0] sm:$0xff]
    %v338 = vld [vmem:[#allocation5 + $0x6b8] sm:$0xff]
    %v339 = vld [vmem:[#allocation5 + $0x6c0] sm:$0xff]
    %v340 = vld [vmem:[#allocation5 + $0x6c8] sm:$0xff]
    %v341 = vld [vmem:[#allocation5 + $0x6d0] sm:$0xff]
    %v342 = vld [vmem:[#allocation5 + $0x6d8] sm:$0xff]
    %v343 = vld [vmem:[#allocation5 + $0x6e0] sm:$0xff]
    %v344 = vld [vmem:[#allocation5 + $0x6e8] sm:$0xff]
    %v345 = vld [vmem:[#allocation5 + $0x6f0] sm:$0xff]
    %v346 = vld [vmem:[#allocation5 + $0x6f8] sm:$0xff]
    %v347 = vld [vmem:[#allocation5 + $0x700] sm:$0xff]
    %v348 = vld [vmem:[#allocation5 + $0x708] sm:$0xff]
    %v349 = vld [vmem:[#allocation5 + $0x710] sm:$0xff]
    %v350 = vld [vmem:[#allocation5 + $0x718] sm:$0xff]
    %v351 = vld [vmem:[#allocation5 + $0x720] sm:$0xff]
    %v352 = vld [vmem:[#allocation5 + $0x728] sm:$0xff]
    %v353 = vld [vmem:[#allocation5 + $0x730] sm:$0xff]
    %v354 = vld [vmem:[#allocation5 + $0x738] sm:$0xff]
    %v355 = vld [vmem:[#allocation5 + $0x740] sm:$0xff]
    %v356 = vld [vmem:[#allocation5 + $0x748] sm:$0xff]
    %v357 = vld [vmem:[#allocation5 + $0x750] sm:$0xff]
    %v358 = vld [vmem:[#allocation5 + $0x758] sm:$0xff]
    %v359 = vld [vmem:[#allocation5 + $0x760] sm:$0xff]
    %v360 = vld [vmem:[#allocation5 + $0x768] sm:$0xff]
    %v361 = vld [vmem:[#allocation5 + $0x770] sm:$0xff]
    %v362 = vld [vmem:[#allocation5 + $0x778] sm:$0xff]
    %v363 = vld [vmem:[#allocation5 + $0x780] sm:$0xff]
    %v364 = vld [vmem:[#allocation5 + $0x788] sm:$0xff]
    %v365 = vld [vmem:[#allocation5 + $0x790] sm:$0xff]
    %v366 = vld [vmem:[#allocation5 + $0x798] sm:$0xff]
    %v367 = vld [vmem:[#allocation5 + $0x7a0] sm:$0xff]
    %v368 = vld [vmem:[#allocation5 + $0x7a8] sm:$0xff]
    %v369 = vld [vmem:[#allocation5 + $0x7b0] sm:$0xff]
    %v370 = vld [vmem:[#allocation5 + $0x7b8] sm:$0xff]
    %v371 = vld [vmem:[#allocation5 + $0x7c0] sm:$0xff]
    %v372 = vld [vmem:[#allocation5 + $0x7c8] sm:$0xff]
    %v373 = vld [vmem:[#allocation5 + $0x7d0] sm:$0xff]
    %v374 = vld [vmem:[#allocation5 + $0x7d8] sm:$0xff]
    %v375 = vld [vmem:[#allocation5 + $0x7e0] sm:$0xff]
    %v376 = vld [vmem:[#allocation5 + $0x7e8] sm:$0xff]
    %v377 = vld [vmem:[#allocation5 + $0x7f0] sm:$0xff]
    %v378 = vld [vmem:[#allocation5 + $0x7f8] sm:$0xff]
    %v379 = vld [vmem:[#allocation5 + $0x800] sm:$0xff]
    %v380 = vld [vmem:[#allocation5 + $0x808] sm:$0xff]
    %v381 = vld [vmem:[#allocation5 + $0x810] sm:$0xff]
    %v382 = vld [vmem:[#allocation5 + $0x818] sm:$0xff]
    %v383 = vld [vmem:[#allocation5 + $0x820] sm:$0xff]
    %v384 = vld [vmem:[#allocation5 + $0x828] sm:$0xff]
    %v385 = vld [vmem:[#allocation5 + $0x830] sm:$0xff]
    %v386 = vld [vmem:[#allocation5 + $0x838] sm:$0xff]
    %v387 = vld [vmem:[#allocation5 + $0x840] sm:$0xff]
    %v388 = vld [vmem:[#allocation5 + $0x848] sm:$0xff]
    %v389 = vld [vmem:[#allocation5 + $0x850] sm:$0xff]
    %v390 = vld [vmem:[#allocation5 + $0x858] sm:$0xff]
    %v391 = vld [vmem:[#allocation5 + $0x860] sm:$0xff]
    %v392 = vld [vmem:[#allocation5 + $0x868] sm:$0xff]
    %v393 = vld [vmem:[#allocation5 + $0x870] sm:$0xff]
    %v394 = vld [vmem:[#allocation5 + $0x878] sm:$0xff]
    %v395 = vld [vmem:[#allocation5 + $0x880] sm:$0xff]
    %v396 = vld [vmem:[#allocation5 + $0x888] sm:$0xff]
    %v397 = vld [vmem:[#allocation5 + $0x890] sm:$0xff]
    %v398 = vld [vmem:[#allocation5 + $0x898] sm:$0xff]
    %v399 = vld [vmem:[#allocation5 + $0x8a0] sm:$0xff]
    %v400 = vld [vmem:[#allocation5 + $0x8a8] sm:$0xff]
    %v401 = vld [vmem:[#allocation5 + $0x8b0] sm:$0xff]
    %v402 = vld [vmem:[#allocation5 + $0x8b8] sm:$0xff]
    %v403 = vld [vmem:[#allocation5 + $0x8c0] sm:$0xff]
    %v404 = vld [vmem:[#allocation5 + $0x8c8] sm:$0xff]
    %v405 = vld [vmem:[#allocation5 + $0x8d0] sm:$0xff]
    %v406 = vld [vmem:[#allocation5 + $0x8d8] sm:$0xff]
    %v407 = vld [vmem:[#allocation5 + $0x8e0] sm:$0xff]
    %v408 = vld [vmem:[#allocation5 + $0x8e8] sm:$0xff]
    %v409 = vld [vmem:[#allocation5 + $0x8f0] sm:$0xff]
    %v410 = vld [vmem:[#allocation5 + $0x8f8] sm:$0xff]
    %v411 = vld [vmem:[#allocation7] sm:$0x3f]
    %v413 = vlaneseq
    %v414 = vshrl.u32 %v413, 7
    %v415 = vsub.s32 0, %v414
    %v416 = vrot.slane %v411, %v415
    %v417 = vlaneseq
    %v418 = vshrl.u32 %v417, 7
    %v419 = vsub.s32 1, %v418
    %v420 = vrot.slane %v411, %v419
    %v421 = vlaneseq
    %v422 = vshrl.u32 %v421, 7
    %v423 = vsub.s32 2, %v422
    %v424 = vrot.slane %v411, %v423
    %v425 = vlaneseq
    %v426 = vshrl.u32 %v425, 7
    %v427 = vsub.s32 3, %v426
    %v428 = vrot.slane %v411, %v427
    %v429 = vlaneseq
    %v430 = vshrl.u32 %v429, 7
    %v431 = vsub.s32 4, %v430
    %v432 = vrot.slane %v411, %v431
    %v433 = vlaneseq
    %v434 = vshrl.u32 %v433, 7
    %v435 = vsub.s32 5, %v434
    %v436 = vrot.slane %v411, %v435
    %v449 = vunpack.c.l.b16 %v117
    %v450 = vunpack.c.h.b16 %v117
    %v451 = vunpack.c.l.b16 %v118
    %v452 = vunpack.c.h.b16 %v118
    %v453 = vunpack.c.l.b16 %v119
    %v454 = vunpack.c.h.b16 %v119
    %v455 = vunpack.c.l.b16 %v120
    %v456 = vunpack.c.h.b16 %v120
    %v457 = vunpack.c.l.b16 %v121
    %v458 = vunpack.c.h.b16 %v121
    %v459 = vunpack.c.l.b16 %v122
    %v460 = vunpack.c.h.b16 %v122
    %v461 = vpack.c.b16 %v455, %v449
    %v462 = vpack.c.b16 %v456, %v450
    %v463 = vpack.c.b16 %v457, %v451
    %v464 = vpack.c.b16 %v458, %v452
    %v465 = vpack.c.b16 %v459, %v453
    %v466 = vpack.c.b16 %v460, %v454
    %v761 = vunpack.c.l.b16 %v123
    %v762 = vunpack.c.h.b16 %v123
    %v763 = vunpack.c.l.b16 %v124
    %v764 = vunpack.c.h.b16 %v124
    %v765 = vunpack.c.l.b16 %v125
    %v766 = vunpack.c.h.b16 %v125
    %v767 = vunpack.c.l.b16 %v126
    %v768 = vunpack.c.h.b16 %v126
    %v769 = vunpack.c.l.b16 %v127
    %v770 = vunpack.c.h.b16 %v127
    %v771 = vunpack.c.l.b16 %v128
    %v772 = vunpack.c.h.b16 %v128
    %v773 = vunpack.c.l.b16 %v129
    %v774 = vunpack.c.h.b16 %v129
    %v775 = vunpack.c.l.b16 %v130
    %v776 = vunpack.c.h.b16 %v130
    %v777 = vunpack.c.l.b16 %v131
    %v778 = vunpack.c.h.b16 %v131
    %v779 = vunpack.c.l.b16 %v132
    %v780 = vunpack.c.h.b16 %v132
    %v781 = vunpack.c.l.b16 %v133
    %v782 = vunpack.c.h.b16 %v133
    %v783 = vunpack.c.l.b16 %v134
    %v784 = vunpack.c.h.b16 %v134
    %v785 = vunpack.c.l.b16 %v135
    %v786 = vunpack.c.h.b16 %v135
    %v787 = vunpack.c.l.b16 %v136
    %v788 = vunpack.c.h.b16 %v136
    %v789 = vunpack.c.l.b16 %v137
    %v790 = vunpack.c.h.b16 %v137
    %v791 = vunpack.c.l.b16 %v138
    %v792 = vunpack.c.h.b16 %v138
    %v793 = vunpack.c.l.b16 %v139
    %v794 = vunpack.c.h.b16 %v139
    %v795 = vunpack.c.l.b16 %v140
    %v796 = vunpack.c.h.b16 %v140
    %v797 = vunpack.c.l.b16 %v141
    %v798 = vunpack.c.h.b16 %v141
    %v799 = vunpack.c.l.b16 %v142
    %v800 = vunpack.c.h.b16 %v142
    %v801 = vunpack.c.l.b16 %v143
    %v802 = vunpack.c.h.b16 %v143
    %v803 = vunpack.c.l.b16 %v144
    %v804 = vunpack.c.h.b16 %v144
    %v805 = vunpack.c.l.b16 %v145
    %v806 = vunpack.c.h.b16 %v145
    %v807 = vunpack.c.l.b16 %v146
    %v808 = vunpack.c.h.b16 %v146
    %v809 = vunpack.c.l.b16 %v147
    %v810 = vunpack.c.h.b16 %v147
    %v811 = vunpack.c.l.b16 %v148
    %v812 = vunpack.c.h.b16 %v148
    %v813 = vunpack.c.l.b16 %v149
    %v814 = vunpack.c.h.b16 %v149
    %v815 = vunpack.c.l.b16 %v150
    %v816 = vunpack.c.h.b16 %v150
    %v817 = vunpack.c.l.b16 %v151
    %v818 = vunpack.c.h.b16 %v151
    %v819 = vunpack.c.l.b16 %v152
    %v820 = vunpack.c.h.b16 %v152
    %v821 = vunpack.c.l.b16 %v153
    %v822 = vunpack.c.h.b16 %v153
    %v823 = vunpack.c.l.b16 %v154
    %v824 = vunpack.c.h.b16 %v154
    %v825 = vunpack.c.l.b16 %v155
    %v826 = vunpack.c.h.b16 %v155
    %v827 = vunpack.c.l.b16 %v156
    %v828 = vunpack.c.h.b16 %v156
    %v829 = vunpack.c.l.b16 %v157
    %v830 = vunpack.c.h.b16 %v157
    %v831 = vunpack.c.l.b16 %v158
    %v832 = vunpack.c.h.b16 %v158
    %v833 = vunpack.c.l.b16 %v159
    %v834 = vunpack.c.h.b16 %v159
    %v835 = vunpack.c.l.b16 %v160
    %v836 = vunpack.c.h.b16 %v160
    %v837 = vunpack.c.l.b16 %v161
    %v838 = vunpack.c.h.b16 %v161
    %v839 = vunpack.c.l.b16 %v162
    %v840 = vunpack.c.h.b16 %v162
    %v841 = vunpack.c.l.b16 %v163
    %v842 = vunpack.c.h.b16 %v163
    %v843 = vunpack.c.l.b16 %v164
    %v844 = vunpack.c.h.b16 %v164
    %v845 = vunpack.c.l.b16 %v165
    %v846 = vunpack.c.h.b16 %v165
    %v847 = vunpack.c.l.b16 %v166
    %v848 = vunpack.c.h.b16 %v166
    %v849 = vunpack.c.l.b16 %v167
    %v850 = vunpack.c.h.b16 %v167
    %v851 = vunpack.c.l.b16 %v168
    %v852 = vunpack.c.h.b16 %v168
    %v853 = vunpack.c.l.b16 %v169
    %v854 = vunpack.c.h.b16 %v169
    %v855 = vunpack.c.l.b16 %v170
    %v856 = vunpack.c.h.b16 %v170
    %v857 = vunpack.c.l.b16 %v171
    %v858 = vunpack.c.h.b16 %v171
    %v859 = vunpack.c.l.b16 %v172
    %v860 = vunpack.c.h.b16 %v172
    %v861 = vunpack.c.l.b16 %v173
    %v862 = vunpack.c.h.b16 %v173
    %v863 = vunpack.c.l.b16 %v174
    %v864 = vunpack.c.h.b16 %v174
    %v865 = vunpack.c.l.b16 %v175
    %v866 = vunpack.c.h.b16 %v175
    %v867 = vunpack.c.l.b16 %v176
    %v868 = vunpack.c.h.b16 %v176
    %v869 = vunpack.c.l.b16 %v177
    %v870 = vunpack.c.h.b16 %v177
    %v871 = vunpack.c.l.b16 %v178
    %v872 = vunpack.c.h.b16 %v178
    %v873 = vunpack.c.l.b16 %v179
    %v874 = vunpack.c.h.b16 %v179
    %v875 = vunpack.c.l.b16 %v180
    %v876 = vunpack.c.h.b16 %v180
    %v877 = vunpack.c.l.b16 %v181
    %v878 = vunpack.c.h.b16 %v181
    %v879 = vunpack.c.l.b16 %v182
    %v880 = vunpack.c.h.b16 %v182
    %v881 = vunpack.c.l.b16 %v183
    %v882 = vunpack.c.h.b16 %v183
    %v883 = vunpack.c.l.b16 %v184
    %v884 = vunpack.c.h.b16 %v184
    %v885 = vunpack.c.l.b16 %v185
    %v886 = vunpack.c.h.b16 %v185
    %v887 = vunpack.c.l.b16 %v186
    %v888 = vunpack.c.h.b16 %v186
    %v889 = vunpack.c.l.b16 %v187
    %v890 = vunpack.c.h.b16 %v187
    %v891 = vunpack.c.l.b16 %v188
    %v892 = vunpack.c.h.b16 %v188
    %v893 = vunpack.c.l.b16 %v189
    %v894 = vunpack.c.h.b16 %v189
    %v895 = vunpack.c.l.b16 %v190
    %v896 = vunpack.c.h.b16 %v190
    %v897 = vunpack.c.l.b16 %v191
    %v898 = vunpack.c.h.b16 %v191
    %v899 = vunpack.c.l.b16 %v192
    %v900 = vunpack.c.h.b16 %v192
    %v901 = vunpack.c.l.b16 %v193
    %v902 = vunpack.c.h.b16 %v193
    %v903 = vunpack.c.l.b16 %v194
    %v904 = vunpack.c.h.b16 %v194
    %v905 = vunpack.c.l.b16 %v195
    %v906 = vunpack.c.h.b16 %v195
    %v907 = vunpack.c.l.b16 %v196
    %v908 = vunpack.c.h.b16 %v196
    %v909 = vunpack.c.l.b16 %v197
    %v910 = vunpack.c.h.b16 %v197
    %v911 = vunpack.c.l.b16 %v198
    %v912 = vunpack.c.h.b16 %v198
    %v913 = vunpack.c.l.b16 %v199
    %v914 = vunpack.c.h.b16 %v199
    %v915 = vunpack.c.l.b16 %v200
    %v916 = vunpack.c.h.b16 %v200
    %v917 = vunpack.c.l.b16 %v201
    %v918 = vunpack.c.h.b16 %v201
    %v919 = vunpack.c.l.b16 %v202
    %v920 = vunpack.c.h.b16 %v202
    %v921 = vunpack.c.l.b16 %v203
    %v922 = vunpack.c.h.b16 %v203
    %v923 = vunpack.c.l.b16 %v204
    %v924 = vunpack.c.h.b16 %v204
    %v925 = vunpack.c.l.b16 %v205
    %v926 = vunpack.c.h.b16 %v205
    %v927 = vunpack.c.l.b16 %v206
    %v928 = vunpack.c.h.b16 %v206
    %v929 = vunpack.c.l.b16 %v207
    %v930 = vunpack.c.h.b16 %v207
    %v931 = vunpack.c.l.b16 %v208
    %v932 = vunpack.c.h.b16 %v208
    %v933 = vunpack.c.l.b16 %v209
    %v934 = vunpack.c.h.b16 %v209
    %v935 = vunpack.c.l.b16 %v210
    %v936 = vunpack.c.h.b16 %v210
    %v937 = vunpack.c.l.b16 %v211
    %v938 = vunpack.c.h.b16 %v211
    %v939 = vunpack.c.l.b16 %v212
    %v940 = vunpack.c.h.b16 %v212
    %v941 = vunpack.c.l.b16 %v213
    %v942 = vunpack.c.h.b16 %v213
    %v943 = vunpack.c.l.b16 %v214
    %v944 = vunpack.c.h.b16 %v214
    %v945 = vunpack.c.l.b16 %v215
    %v946 = vunpack.c.h.b16 %v215
    %v947 = vunpack.c.l.b16 %v216
    %v948 = vunpack.c.h.b16 %v216
    %v949 = vunpack.c.l.b16 %v217
    %v950 = vunpack.c.h.b16 %v217
    %v951 = vunpack.c.l.b16 %v218
    %v952 = vunpack.c.h.b16 %v218
    %v953 = vunpack.c.l.b16 %v219
    %v954 = vunpack.c.h.b16 %v219
    %v955 = vunpack.c.l.b16 %v220
    %v956 = vunpack.c.h.b16 %v220
    %v957 = vunpack.c.l.b16 %v221
    %v958 = vunpack.c.h.b16 %v221
    %v959 = vunpack.c.l.b16 %v222
    %v960 = vunpack.c.h.b16 %v222
    %v961 = vunpack.c.l.b16 %v223
    %v962 = vunpack.c.h.b16 %v223
    %v963 = vunpack.c.l.b16 %v224
    %v964 = vunpack.c.h.b16 %v224
    %v965 = vunpack.c.l.b16 %v225
    %v966 = vunpack.c.h.b16 %v225
    %v967 = vunpack.c.l.b16 %v226
    %v968 = vunpack.c.h.b16 %v226
    %v969 = vunpack.c.l.b16 %v227
    %v970 = vunpack.c.h.b16 %v227
    %v971 = vunpack.c.l.b16 %v228
    %v972 = vunpack.c.h.b16 %v228
    %v973 = vunpack.c.l.b16 %v229
    %v974 = vunpack.c.h.b16 %v229
    %v975 = vunpack.c.l.b16 %v230
    %v976 = vunpack.c.h.b16 %v230
    %v977 = vunpack.c.l.b16 %v231
    %v978 = vunpack.c.h.b16 %v231
    %v979 = vunpack.c.l.b16 %v232
    %v980 = vunpack.c.h.b16 %v232
    %v981 = vunpack.c.l.b16 %v233
    %v982 = vunpack.c.h.b16 %v233
    %v983 = vunpack.c.l.b16 %v234
    %v984 = vunpack.c.h.b16 %v234
    %v985 = vunpack.c.l.b16 %v235
    %v986 = vunpack.c.h.b16 %v235
    %v987 = vunpack.c.l.b16 %v236
    %v988 = vunpack.c.h.b16 %v236
    %v989 = vunpack.c.l.b16 %v237
    %v990 = vunpack.c.h.b16 %v237
    %v991 = vunpack.c.l.b16 %v238
    %v992 = vunpack.c.h.b16 %v238
    %v993 = vunpack.c.l.b16 %v239
    %v994 = vunpack.c.h.b16 %v239
    %v995 = vunpack.c.l.b16 %v240
    %v996 = vunpack.c.h.b16 %v240
    %v997 = vunpack.c.l.b16 %v241
    %v998 = vunpack.c.h.b16 %v241
    %v999 = vunpack.c.l.b16 %v242
    %v1000 = vunpack.c.h.b16 %v242
    %v1001 = vunpack.c.l.b16 %v243
    %v1002 = vunpack.c.h.b16 %v243
    %v1003 = vunpack.c.l.b16 %v244
    %v1004 = vunpack.c.h.b16 %v244
    %v1005 = vunpack.c.l.b16 %v245
    %v1006 = vunpack.c.h.b16 %v245
    %v1007 = vunpack.c.l.b16 %v246
    %v1008 = vunpack.c.h.b16 %v246
    %v1009 = vunpack.c.l.b16 %v247
    %v1010 = vunpack.c.h.b16 %v247
    %v1011 = vunpack.c.l.b16 %v248
    %v1012 = vunpack.c.h.b16 %v248
    %v1013 = vunpack.c.l.b16 %v249
    %v1014 = vunpack.c.h.b16 %v249
    %v1015 = vunpack.c.l.b16 %v250
    %v1016 = vunpack.c.h.b16 %v250
    %v1017 = vunpack.c.l.b16 %v251
    %v1018 = vunpack.c.h.b16 %v251
    %v1019 = vunpack.c.l.b16 %v252
    %v1020 = vunpack.c.h.b16 %v252
    %v1021 = vunpack.c.l.b16 %v253
    %v1022 = vunpack.c.h.b16 %v253
    %v1023 = vunpack.c.l.b16 %v254
    %v1024 = vunpack.c.h.b16 %v254
    %v1025 = vunpack.c.l.b16 %v255
    %v1026 = vunpack.c.h.b16 %v255
    %v1027 = vunpack.c.l.b16 %v256
    %v1028 = vunpack.c.h.b16 %v256
    %v1029 = vunpack.c.l.b16 %v257
    %v1030 = vunpack.c.h.b16 %v257
    %v1031 = vunpack.c.l.b16 %v258
    %v1032 = vunpack.c.h.b16 %v258
    %v1033 = vunpack.c.l.b16 %v259
    %v1034 = vunpack.c.h.b16 %v259
    %v1035 = vunpack.c.l.b16 %v260
    %v1036 = vunpack.c.h.b16 %v260
    %v1037 = vunpack.c.l.b16 %v261
    %v1038 = vunpack.c.h.b16 %v261
    %v1039 = vunpack.c.l.b16 %v262
    %v1040 = vunpack.c.h.b16 %v262
    %v1041 = vunpack.c.l.b16 %v263
    %v1042 = vunpack.c.h.b16 %v263
    %v1043 = vunpack.c.l.b16 %v264
    %v1044 = vunpack.c.h.b16 %v264
    %v1045 = vunpack.c.l.b16 %v265
    %v1046 = vunpack.c.h.b16 %v265
    %v1047 = vunpack.c.l.b16 %v266
    %v1048 = vunpack.c.h.b16 %v266
    %v1049 = vunpack.c.l.b16 %v267
    %v1050 = vunpack.c.h.b16 %v267
    %v1051 = vunpack.c.l.b16 %v268
    %v1052 = vunpack.c.h.b16 %v268
    %v1053 = vunpack.c.l.b16 %v269
    %v1054 = vunpack.c.h.b16 %v269
    %v1055 = vunpack.c.l.b16 %v270
    %v1056 = vunpack.c.h.b16 %v270
    %v1057 = vunpack.c.l.b16 %v271
    %v1058 = vunpack.c.h.b16 %v271
    %v1059 = vunpack.c.l.b16 %v272
    %v1060 = vunpack.c.h.b16 %v272
    %v1061 = vunpack.c.l.b16 %v273
    %v1062 = vunpack.c.h.b16 %v273
    %v1063 = vunpack.c.l.b16 %v274
    %v1064 = vunpack.c.h.b16 %v274
    %v1065 = vunpack.c.l.b16 %v275
    %v1066 = vunpack.c.h.b16 %v275
    %v1067 = vunpack.c.l.b16 %v276
    %v1068 = vunpack.c.h.b16 %v276
    %v1069 = vunpack.c.l.b16 %v277
    %v1070 = vunpack.c.h.b16 %v277
    %v1071 = vunpack.c.l.b16 %v278
    %v1072 = vunpack.c.h.b16 %v278
    %v1073 = vunpack.c.l.b16 %v279
    %v1074 = vunpack.c.h.b16 %v279
    %v1075 = vunpack.c.l.b16 %v280
    %v1076 = vunpack.c.h.b16 %v280
    %v1077 = vunpack.c.l.b16 %v281
    %v1078 = vunpack.c.h.b16 %v281
    %v1079 = vunpack.c.l.b16 %v282
    %v1080 = vunpack.c.h.b16 %v282
    %v1081 = vunpack.c.l.b16 %v283
    %v1082 = vunpack.c.h.b16 %v283
    %v1083 = vunpack.c.l.b16 %v284
    %v1084 = vunpack.c.h.b16 %v284
    %v1085 = vunpack.c.l.b16 %v285
    %v1086 = vunpack.c.h.b16 %v285
    %v1087 = vunpack.c.l.b16 %v286
    %v1088 = vunpack.c.h.b16 %v286
    %v1089 = vunpack.c.l.b16 %v287
    %v1090 = vunpack.c.h.b16 %v287
    %v1091 = vunpack.c.l.b16 %v288
    %v1092 = vunpack.c.h.b16 %v288
    %v1093 = vunpack.c.l.b16 %v289
    %v1094 = vunpack.c.h.b16 %v289
    %v1095 = vunpack.c.l.b16 %v290
    %v1096 = vunpack.c.h.b16 %v290
    %v1097 = vunpack.c.l.b16 %v291
    %v1098 = vunpack.c.h.b16 %v291
    %v1099 = vunpack.c.l.b16 %v292
    %v1100 = vunpack.c.h.b16 %v292
    %v1101 = vunpack.c.l.b16 %v293
    %v1102 = vunpack.c.h.b16 %v293
    %v1103 = vunpack.c.l.b16 %v294
    %v1104 = vunpack.c.h.b16 %v294
    %v1105 = vunpack.c.l.b16 %v295
    %v1106 = vunpack.c.h.b16 %v295
    %v1107 = vunpack.c.l.b16 %v296
    %v1108 = vunpack.c.h.b16 %v296
    %v1109 = vunpack.c.l.b16 %v297
    %v1110 = vunpack.c.h.b16 %v297
    %v1111 = vunpack.c.l.b16 %v298
    %v1112 = vunpack.c.h.b16 %v298
    %v1113 = vunpack.c.l.b16 %v299
    %v1114 = vunpack.c.h.b16 %v299
    %v1115 = vunpack.c.l.b16 %v300
    %v1116 = vunpack.c.h.b16 %v300
    %v1117 = vunpack.c.l.b16 %v301
    %v1118 = vunpack.c.h.b16 %v301
    %v1119 = vunpack.c.l.b16 %v302
    %v1120 = vunpack.c.h.b16 %v302
    %v1121 = vunpack.c.l.b16 %v303
    %v1122 = vunpack.c.h.b16 %v303
    %v1123 = vunpack.c.l.b16 %v304
    %v1124 = vunpack.c.h.b16 %v304
    %v1125 = vunpack.c.l.b16 %v305
    %v1126 = vunpack.c.h.b16 %v305
    %v1127 = vunpack.c.l.b16 %v306
    %v1128 = vunpack.c.h.b16 %v306
    %v1129 = vunpack.c.l.b16 %v307
    %v1130 = vunpack.c.h.b16 %v307
    %v1131 = vunpack.c.l.b16 %v308
    %v1132 = vunpack.c.h.b16 %v308
    %v1133 = vunpack.c.l.b16 %v309
    %v1134 = vunpack.c.h.b16 %v309
    %v1135 = vunpack.c.l.b16 %v310
    %v1136 = vunpack.c.h.b16 %v310
    %v1137 = vunpack.c.l.b16 %v311
    %v1138 = vunpack.c.h.b16 %v311
    %v1139 = vunpack.c.l.b16 %v312
    %v1140 = vunpack.c.h.b16 %v312
    %v1141 = vunpack.c.l.b16 %v313
    %v1142 = vunpack.c.h.b16 %v313
    %v1143 = vunpack.c.l.b16 %v314
    %v1144 = vunpack.c.h.b16 %v314
    %v1145 = vunpack.c.l.b16 %v315
    %v1146 = vunpack.c.h.b16 %v315
    %v1147 = vunpack.c.l.b16 %v316
    %v1148 = vunpack.c.h.b16 %v316
    %v1149 = vunpack.c.l.b16 %v317
    %v1150 = vunpack.c.h.b16 %v317
    %v1151 = vunpack.c.l.b16 %v318
    %v1152 = vunpack.c.h.b16 %v318
    %v1153 = vunpack.c.l.b16 %v319
    %v1154 = vunpack.c.h.b16 %v319
    %v1155 = vunpack.c.l.b16 %v320
    %v1156 = vunpack.c.h.b16 %v320
    %v1157 = vunpack.c.l.b16 %v321
    %v1158 = vunpack.c.h.b16 %v321
    %v1159 = vunpack.c.l.b16 %v322
    %v1160 = vunpack.c.h.b16 %v322
    %v1161 = vunpack.c.l.b16 %v323
    %v1162 = vunpack.c.h.b16 %v323
    %v1163 = vunpack.c.l.b16 %v324
    %v1164 = vunpack.c.h.b16 %v324
    %v1165 = vunpack.c.l.b16 %v325
    %v1166 = vunpack.c.h.b16 %v325
    %v1167 = vunpack.c.l.b16 %v326
    %v1168 = vunpack.c.h.b16 %v326
    %v1169 = vunpack.c.l.b16 %v327
    %v1170 = vunpack.c.h.b16 %v327
    %v1171 = vunpack.c.l.b16 %v328
    %v1172 = vunpack.c.h.b16 %v328
    %v1173 = vunpack.c.l.b16 %v329
    %v1174 = vunpack.c.h.b16 %v329
    %v1175 = vunpack.c.l.b16 %v330
    %v1176 = vunpack.c.h.b16 %v330
    %v1177 = vunpack.c.l.b16 %v331
    %v1178 = vunpack.c.h.b16 %v331
    %v1179 = vunpack.c.l.b16 %v332
    %v1180 = vunpack.c.h.b16 %v332
    %v1181 = vunpack.c.l.b16 %v333
    %v1182 = vunpack.c.h.b16 %v333
    %v1183 = vunpack.c.l.b16 %v334
    %v1184 = vunpack.c.h.b16 %v334
    %v1185 = vunpack.c.l.b16 %v335
    %v1186 = vunpack.c.h.b16 %v335
    %v1187 = vunpack.c.l.b16 %v336
    %v1188 = vunpack.c.h.b16 %v336
    %v1189 = vunpack.c.l.b16 %v337
    %v1190 = vunpack.c.h.b16 %v337
    %v1191 = vunpack.c.l.b16 %v338
    %v1192 = vunpack.c.h.b16 %v338
    %v1193 = vunpack.c.l.b16 %v339
    %v1194 = vunpack.c.h.b16 %v339
    %v1195 = vunpack.c.l.b16 %v340
    %v1196 = vunpack.c.h.b16 %v340
    %v1197 = vunpack.c.l.b16 %v341
    %v1198 = vunpack.c.h.b16 %v341
    %v1199 = vunpack.c.l.b16 %v342
    %v1200 = vunpack.c.h.b16 %v342
    %v1201 = vunpack.c.l.b16 %v343
    %v1202 = vunpack.c.h.b16 %v343
    %v1203 = vunpack.c.l.b16 %v344
    %v1204 = vunpack.c.h.b16 %v344
    %v1205 = vunpack.c.l.b16 %v345
    %v1206 = vunpack.c.h.b16 %v345
    %v1207 = vunpack.c.l.b16 %v346
    %v1208 = vunpack.c.h.b16 %v346
    %v1209 = vunpack.c.l.b16 %v347
    %v1210 = vunpack.c.h.b16 %v347
    %v1211 = vunpack.c.l.b16 %v348
    %v1212 = vunpack.c.h.b16 %v348
    %v1213 = vunpack.c.l.b16 %v349
    %v1214 = vunpack.c.h.b16 %v349
    %v1215 = vunpack.c.l.b16 %v350
    %v1216 = vunpack.c.h.b16 %v350
    %v1217 = vunpack.c.l.b16 %v351
    %v1218 = vunpack.c.h.b16 %v351
    %v1219 = vunpack.c.l.b16 %v352
    %v1220 = vunpack.c.h.b16 %v352
    %v1221 = vunpack.c.l.b16 %v353
    %v1222 = vunpack.c.h.b16 %v353
    %v1223 = vunpack.c.l.b16 %v354
    %v1224 = vunpack.c.h.b16 %v354
    %v1225 = vunpack.c.l.b16 %v355
    %v1226 = vunpack.c.h.b16 %v355
    %v1227 = vunpack.c.l.b16 %v356
    %v1228 = vunpack.c.h.b16 %v356
    %v1229 = vunpack.c.l.b16 %v357
    %v1230 = vunpack.c.h.b16 %v357
    %v1231 = vunpack.c.l.b16 %v358
    %v1232 = vunpack.c.h.b16 %v358
    %v1233 = vunpack.c.l.b16 %v359
    %v1234 = vunpack.c.h.b16 %v359
    %v1235 = vunpack.c.l.b16 %v360
    %v1236 = vunpack.c.h.b16 %v360
    %v1237 = vunpack.c.l.b16 %v361
    %v1238 = vunpack.c.h.b16 %v361
    %v1239 = vunpack.c.l.b16 %v362
    %v1240 = vunpack.c.h.b16 %v362
    %v1241 = vunpack.c.l.b16 %v363
    %v1242 = vunpack.c.h.b16 %v363
    %v1243 = vunpack.c.l.b16 %v364
    %v1244 = vunpack.c.h.b16 %v364
    %v1245 = vunpack.c.l.b16 %v365
    %v1246 = vunpack.c.h.b16 %v365
    %v1247 = vunpack.c.l.b16 %v366
    %v1248 = vunpack.c.h.b16 %v366
    %v1249 = vunpack.c.l.b16 %v367
    %v1250 = vunpack.c.h.b16 %v367
    %v1251 = vunpack.c.l.b16 %v368
    %v1252 = vunpack.c.h.b16 %v368
    %v1253 = vunpack.c.l.b16 %v369
    %v1254 = vunpack.c.h.b16 %v369
    %v1255 = vunpack.c.l.b16 %v370
    %v1256 = vunpack.c.h.b16 %v370
    %v1257 = vunpack.c.l.b16 %v371
    %v1258 = vunpack.c.h.b16 %v371
    %v1259 = vunpack.c.l.b16 %v372
    %v1260 = vunpack.c.h.b16 %v372
    %v1261 = vunpack.c.l.b16 %v373
    %v1262 = vunpack.c.h.b16 %v373
    %v1263 = vunpack.c.l.b16 %v374
    %v1264 = vunpack.c.h.b16 %v374
    %v1265 = vunpack.c.l.b16 %v375
    %v1266 = vunpack.c.h.b16 %v375
    %v1267 = vunpack.c.l.b16 %v376
    %v1268 = vunpack.c.h.b16 %v376
    %v1269 = vunpack.c.l.b16 %v377
    %v1270 = vunpack.c.h.b16 %v377
    %v1271 = vunpack.c.l.b16 %v378
    %v1272 = vunpack.c.h.b16 %v378
    %v1273 = vunpack.c.l.b16 %v379
    %v1274 = vunpack.c.h.b16 %v379
    %v1275 = vunpack.c.l.b16 %v380
    %v1276 = vunpack.c.h.b16 %v380
    %v1277 = vunpack.c.l.b16 %v381
    %v1278 = vunpack.c.h.b16 %v381
    %v1279 = vunpack.c.l.b16 %v382
    %v1280 = vunpack.c.h.b16 %v382
    %v1281 = vunpack.c.l.b16 %v383
    %v1282 = vunpack.c.h.b16 %v383
    %v1283 = vunpack.c.l.b16 %v384
    %v1284 = vunpack.c.h.b16 %v384
    %v1285 = vunpack.c.l.b16 %v385
    %v1286 = vunpack.c.h.b16 %v385
    %v1287 = vunpack.c.l.b16 %v386
    %v1288 = vunpack.c.h.b16 %v386
    %v1289 = vunpack.c.l.b16 %v387
    %v1290 = vunpack.c.h.b16 %v387
    %v1291 = vunpack.c.l.b16 %v388
    %v1292 = vunpack.c.h.b16 %v388
    %v1293 = vunpack.c.l.b16 %v389
    %v1294 = vunpack.c.h.b16 %v389
    %v1295 = vunpack.c.l.b16 %v390
    %v1296 = vunpack.c.h.b16 %v390
    %v1297 = vunpack.c.l.b16 %v391
    %v1298 = vunpack.c.h.b16 %v391
    %v1299 = vunpack.c.l.b16 %v392
    %v1300 = vunpack.c.h.b16 %v392
    %v1301 = vunpack.c.l.b16 %v393
    %v1302 = vunpack.c.h.b16 %v393
    %v1303 = vunpack.c.l.b16 %v394
    %v1304 = vunpack.c.h.b16 %v394
    %v1305 = vunpack.c.l.b16 %v395
    %v1306 = vunpack.c.h.b16 %v395
    %v1307 = vunpack.c.l.b16 %v396
    %v1308 = vunpack.c.h.b16 %v396
    %v1309 = vunpack.c.l.b16 %v397
    %v1310 = vunpack.c.h.b16 %v397
    %v1311 = vunpack.c.l.b16 %v398
    %v1312 = vunpack.c.h.b16 %v398
    %v1313 = vunpack.c.l.b16 %v399
    %v1314 = vunpack.c.h.b16 %v399
    %v1315 = vunpack.c.l.b16 %v400
    %v1316 = vunpack.c.h.b16 %v400
    %v1317 = vunpack.c.l.b16 %v401
    %v1318 = vunpack.c.h.b16 %v401
    %v1319 = vunpack.c.l.b16 %v402
    %v1320 = vunpack.c.h.b16 %v402
    %v1321 = vunpack.c.l.b16 %v403
    %v1322 = vunpack.c.h.b16 %v403
    %v1323 = vunpack.c.l.b16 %v404
    %v1324 = vunpack.c.h.b16 %v404
    %v1325 = vunpack.c.l.b16 %v405
    %v1326 = vunpack.c.h.b16 %v405
    %v1327 = vunpack.c.l.b16 %v406
    %v1328 = vunpack.c.h.b16 %v406
    %v1329 = vunpack.c.l.b16 %v407
    %v1330 = vunpack.c.h.b16 %v407
    %v1331 = vunpack.c.l.b16 %v408
    %v1332 = vunpack.c.h.b16 %v408
    %v1333 = vunpack.c.l.b16 %v409
    %v1334 = vunpack.c.h.b16 %v409
    %v1335 = vunpack.c.l.b16 %v410
    %v1336 = vunpack.c.h.b16 %v410
    %v1337 = vpack.c.b16 %v767, %v761
    %v1338 = vpack.c.b16 %v768, %v762
    %v1339 = vpack.c.b16 %v769, %v763
    %v1340 = vpack.c.b16 %v770, %v764
    %v1341 = vpack.c.b16 %v771, %v765
    %v1342 = vpack.c.b16 %v772, %v766
    %v1343 = vpack.c.b16 %v779, %v773
    %v1344 = vpack.c.b16 %v780, %v774
    %v1345 = vpack.c.b16 %v781, %v775
    %v1346 = vpack.c.b16 %v782, %v776
    %v1347 = vpack.c.b16 %v783, %v777
    %v1348 = vpack.c.b16 %v784, %v778
    %v1349 = vpack.c.b16 %v791, %v785
    %v1350 = vpack.c.b16 %v792, %v786
    %v1351 = vpack.c.b16 %v793, %v787
    %v1352 = vpack.c.b16 %v794, %v788
    %v1353 = vpack.c.b16 %v795, %v789
    %v1354 = vpack.c.b16 %v796, %v790
    %v1355 = vpack.c.b16 %v803, %v797
    %v1356 = vpack.c.b16 %v804, %v798
    %v1357 = vpack.c.b16 %v805, %v799
    %v1358 = vpack.c.b16 %v806, %v800
    %v1359 = vpack.c.b16 %v807, %v801
    %v1360 = vpack.c.b16 %v808, %v802
    %v1361 = vpack.c.b16 %v815, %v809
    %v1362 = vpack.c.b16 %v816, %v810
    %v1363 = vpack.c.b16 %v817, %v811
    %v1364 = vpack.c.b16 %v818, %v812
    %v1365 = vpack.c.b16 %v819, %v813
    %v1366 = vpack.c.b16 %v820, %v814
    %v1367 = vpack.c.b16 %v827, %v821
    %v1368 = vpack.c.b16 %v828, %v822
    %v1369 = vpack.c.b16 %v829, %v823
    %v1370 = vpack.c.b16 %v830, %v824
    %v1371 = vpack.c.b16 %v831, %v825
    %v1372 = vpack.c.b16 %v832, %v826
    %v1373 = vpack.c.b16 %v839, %v833
    %v1374 = vpack.c.b16 %v840, %v834
    %v1375 = vpack.c.b16 %v841, %v835
    %v1376 = vpack.c.b16 %v842, %v836
    %v1377 = vpack.c.b16 %v843, %v837
    %v1378 = vpack.c.b16 %v844, %v838
    %v1379 = vpack.c.b16 %v851, %v845
    %v1380 = vpack.c.b16 %v852, %v846
    %v1381 = vpack.c.b16 %v853, %v847
    %v1382 = vpack.c.b16 %v854, %v848
    %v1383 = vpack.c.b16 %v855, %v849
    %v1384 = vpack.c.b16 %v856, %v850
    %v1385 = vpack.c.b16 %v863, %v857
    %v1386 = vpack.c.b16 %v864, %v858
    %v1387 = vpack.c.b16 %v865, %v859
    %v1388 = vpack.c.b16 %v866, %v860
    %v1389 = vpack.c.b16 %v867, %v861
    %v1390 = vpack.c.b16 %v868, %v862
    %v1391 = vpack.c.b16 %v875, %v869
    %v1392 = vpack.c.b16 %v876, %v870
    %v1393 = vpack.c.b16 %v877, %v871
    %v1394 = vpack.c.b16 %v878, %v872
    %v1395 = vpack.c.b16 %v879, %v873
    %v1396 = vpack.c.b16 %v880, %v874
    %v1397 = vpack.c.b16 %v887, %v881
    %v1398 = vpack.c.b16 %v888, %v882
    %v1399 = vpack.c.b16 %v889, %v883
    %v1400 = vpack.c.b16 %v890, %v884
    %v1401 = vpack.c.b16 %v891, %v885
    %v1402 = vpack.c.b16 %v892, %v886
    %v1403 = vpack.c.b16 %v899, %v893
    %v1404 = vpack.c.b16 %v900, %v894
    %v1405 = vpack.c.b16 %v901, %v895
    %v1406 = vpack.c.b16 %v902, %v896
    %v1407 = vpack.c.b16 %v903, %v897
    %v1408 = vpack.c.b16 %v904, %v898
    %v1409 = vpack.c.b16 %v911, %v905
    %v1410 = vpack.c.b16 %v912, %v906
    %v1411 = vpack.c.b16 %v913, %v907
    %v1412 = vpack.c.b16 %v914, %v908
    %v1413 = vpack.c.b16 %v915, %v909
    %v1414 = vpack.c.b16 %v916, %v910
    %v1415 = vpack.c.b16 %v923, %v917
    %v1416 = vpack.c.b16 %v924, %v918
    %v1417 = vpack.c.b16 %v925, %v919
    %v1418 = vpack.c.b16 %v926, %v920
    %v1419 = vpack.c.b16 %v927, %v921
    %v1420 = vpack.c.b16 %v928, %v922
    %v1421 = vpack.c.b16 %v935, %v929
    %v1422 = vpack.c.b16 %v936, %v930
    %v1423 = vpack.c.b16 %v937, %v931
    %v1424 = vpack.c.b16 %v938, %v932
    %v1425 = vpack.c.b16 %v939, %v933
    %v1426 = vpack.c.b16 %v940, %v934
    %v1427 = vpack.c.b16 %v947, %v941
    %v1428 = vpack.c.b16 %v948, %v942
    %v1429 = vpack.c.b16 %v949, %v943
    %v1430 = vpack.c.b16 %v950, %v944
    %v1431 = vpack.c.b16 %v951, %v945
    %v1432 = vpack.c.b16 %v952, %v946
    %v1433 = vpack.c.b16 %v959, %v953
    %v1434 = vpack.c.b16 %v960, %v954
    %v1435 = vpack.c.b16 %v961, %v955
    %v1436 = vpack.c.b16 %v962, %v956
    %v1437 = vpack.c.b16 %v963, %v957
    %v1438 = vpack.c.b16 %v964, %v958
    %v1439 = vpack.c.b16 %v971, %v965
    %v1440 = vpack.c.b16 %v972, %v966
    %v1441 = vpack.c.b16 %v973, %v967
    %v1442 = vpack.c.b16 %v974, %v968
    %v1443 = vpack.c.b16 %v975, %v969
    %v1444 = vpack.c.b16 %v976, %v970
    %v1445 = vpack.c.b16 %v983, %v977
    %v1446 = vpack.c.b16 %v984, %v978
    %v1447 = vpack.c.b16 %v985, %v979
    %v1448 = vpack.c.b16 %v986, %v980
    %v1449 = vpack.c.b16 %v987, %v981
    %v1450 = vpack.c.b16 %v988, %v982
    %v1451 = vpack.c.b16 %v995, %v989
    %v1452 = vpack.c.b16 %v996, %v990
    %v1453 = vpack.c.b16 %v997, %v991
    %v1454 = vpack.c.b16 %v998, %v992
    %v1455 = vpack.c.b16 %v999, %v993
    %v1456 = vpack.c.b16 %v1000, %v994
    %v1457 = vpack.c.b16 %v1007, %v1001
    %v1458 = vpack.c.b16 %v1008, %v1002
    %v1459 = vpack.c.b16 %v1009, %v1003
    %v1460 = vpack.c.b16 %v1010, %v1004
    %v1461 = vpack.c.b16 %v1011, %v1005
    %v1462 = vpack.c.b16 %v1012, %v1006
    %v1463 = vpack.c.b16 %v1019, %v1013
    %v1464 = vpack.c.b16 %v1020, %v1014
    %v1465 = vpack.c.b16 %v1021, %v1015
    %v1466 = vpack.c.b16 %v1022, %v1016
    %v1467 = vpack.c.b16 %v1023, %v1017
    %v1468 = vpack.c.b16 %v1024, %v1018
    %v1469 = vpack.c.b16 %v1031, %v1025
    %v1470 = vpack.c.b16 %v1032, %v1026
    %v1471 = vpack.c.b16 %v1033, %v1027
    %v1472 = vpack.c.b16 %v1034, %v1028
    %v1473 = vpack.c.b16 %v1035, %v1029
    %v1474 = vpack.c.b16 %v1036, %v1030
    %v1475 = vpack.c.b16 %v1043, %v1037
    %v1476 = vpack.c.b16 %v1044, %v1038
    %v1477 = vpack.c.b16 %v1045, %v1039
    %v1478 = vpack.c.b16 %v1046, %v1040
    %v1479 = vpack.c.b16 %v1047, %v1041
    %v1480 = vpack.c.b16 %v1048, %v1042
    %v1481 = vpack.c.b16 %v1055, %v1049
    %v1482 = vpack.c.b16 %v1056, %v1050
    %v1483 = vpack.c.b16 %v1057, %v1051
    %v1484 = vpack.c.b16 %v1058, %v1052
    %v1485 = vpack.c.b16 %v1059, %v1053
    %v1486 = vpack.c.b16 %v1060, %v1054
    %v1487 = vpack.c.b16 %v1067, %v1061
    %v1488 = vpack.c.b16 %v1068, %v1062
    %v1489 = vpack.c.b16 %v1069, %v1063
    %v1490 = vpack.c.b16 %v1070, %v1064
    %v1491 = vpack.c.b16 %v1071, %v1065
    %v1492 = vpack.c.b16 %v1072, %v1066
    %v1493 = vpack.c.b16 %v1079, %v1073
    %v1494 = vpack.c.b16 %v1080, %v1074
    %v1495 = vpack.c.b16 %v1081, %v1075
    %v1496 = vpack.c.b16 %v1082, %v1076
    %v1497 = vpack.c.b16 %v1083, %v1077
    %v1498 = vpack.c.b16 %v1084, %v1078
    %v1499 = vpack.c.b16 %v1091, %v1085
    %v1500 = vpack.c.b16 %v1092, %v1086
    %v1501 = vpack.c.b16 %v1093, %v1087
    %v1502 = vpack.c.b16 %v1094, %v1088
    %v1503 = vpack.c.b16 %v1095, %v1089
    %v1504 = vpack.c.b16 %v1096, %v1090
    %v1505 = vpack.c.b16 %v1103, %v1097
    %v1506 = vpack.c.b16 %v1104, %v1098
    %v1507 = vpack.c.b16 %v1105, %v1099
    %v1508 = vpack.c.b16 %v1106, %v1100
    %v1509 = vpack.c.b16 %v1107, %v1101
    %v1510 = vpack.c.b16 %v1108, %v1102
    %v1511 = vpack.c.b16 %v1115, %v1109
    %v1512 = vpack.c.b16 %v1116, %v1110
    %v1513 = vpack.c.b16 %v1117, %v1111
    %v1514 = vpack.c.b16 %v1118, %v1112
    %v1515 = vpack.c.b16 %v1119, %v1113
    %v1516 = vpack.c.b16 %v1120, %v1114
    %v1517 = vpack.c.b16 %v1127, %v1121
    %v1518 = vpack.c.b16 %v1128, %v1122
    %v1519 = vpack.c.b16 %v1129, %v1123
    %v1520 = vpack.c.b16 %v1130, %v1124
    %v1521 = vpack.c.b16 %v1131, %v1125
    %v1522 = vpack.c.b16 %v1132, %v1126
    %v1523 = vpack.c.b16 %v1139, %v1133
    %v1524 = vpack.c.b16 %v1140, %v1134
    %v1525 = vpack.c.b16 %v1141, %v1135
    %v1526 = vpack.c.b16 %v1142, %v1136
    %v1527 = vpack.c.b16 %v1143, %v1137
    %v1528 = vpack.c.b16 %v1144, %v1138
    %v1529 = vpack.c.b16 %v1151, %v1145
    %v1530 = vpack.c.b16 %v1152, %v1146
    %v1531 = vpack.c.b16 %v1153, %v1147
    %v1532 = vpack.c.b16 %v1154, %v1148
    %v1533 = vpack.c.b16 %v1155, %v1149
    %v1534 = vpack.c.b16 %v1156, %v1150
    %v1535 = vpack.c.b16 %v1163, %v1157
    %v1536 = vpack.c.b16 %v1164, %v1158
    %v1537 = vpack.c.b16 %v1165, %v1159
    %v1538 = vpack.c.b16 %v1166, %v1160
    %v1539 = vpack.c.b16 %v1167, %v1161
    %v1540 = vpack.c.b16 %v1168, %v1162
    %v1541 = vpack.c.b16 %v1175, %v1169
    %v1542 = vpack.c.b16 %v1176, %v1170
    %v1543 = vpack.c.b16 %v1177, %v1171
    %v1544 = vpack.c.b16 %v1178, %v1172
    %v1545 = vpack.c.b16 %v1179, %v1173
    %v1546 = vpack.c.b16 %v1180, %v1174
    %v1547 = vpack.c.b16 %v1187, %v1181
    %v1548 = vpack.c.b16 %v1188, %v1182
    %v1549 = vpack.c.b16 %v1189, %v1183
    %v1550 = vpack.c.b16 %v1190, %v1184
    %v1551 = vpack.c.b16 %v1191, %v1185
    %v1552 = vpack.c.b16 %v1192, %v1186
    %v1553 = vpack.c.b16 %v1199, %v1193
    %v1554 = vpack.c.b16 %v1200, %v1194
    %v1555 = vpack.c.b16 %v1201, %v1195
    %v1556 = vpack.c.b16 %v1202, %v1196
    %v1557 = vpack.c.b16 %v1203, %v1197
    %v1558 = vpack.c.b16 %v1204, %v1198
    %v1559 = vpack.c.b16 %v1211, %v1205
    %v1560 = vpack.c.b16 %v1212, %v1206
    %v1561 = vpack.c.b16 %v1213, %v1207
    %v1562 = vpack.c.b16 %v1214, %v1208
    %v1563 = vpack.c.b16 %v1215, %v1209
    %v1564 = vpack.c.b16 %v1216, %v1210
    %v1565 = vpack.c.b16 %v1223, %v1217
    %v1566 = vpack.c.b16 %v1224, %v1218
    %v1567 = vpack.c.b16 %v1225, %v1219
    %v1568 = vpack.c.b16 %v1226, %v1220
    %v1569 = vpack.c.b16 %v1227, %v1221
    %v1570 = vpack.c.b16 %v1228, %v1222
    %v1571 = vpack.c.b16 %v1235, %v1229
    %v1572 = vpack.c.b16 %v1236, %v1230
    %v1573 = vpack.c.b16 %v1237, %v1231
    %v1574 = vpack.c.b16 %v1238, %v1232
    %v1575 = vpack.c.b16 %v1239, %v1233
    %v1576 = vpack.c.b16 %v1240, %v1234
    %v1577 = vpack.c.b16 %v1247, %v1241
    %v1578 = vpack.c.b16 %v1248, %v1242
    %v1579 = vpack.c.b16 %v1249, %v1243
    %v1580 = vpack.c.b16 %v1250, %v1244
    %v1581 = vpack.c.b16 %v1251, %v1245
    %v1582 = vpack.c.b16 %v1252, %v1246
    %v1583 = vpack.c.b16 %v1259, %v1253
    %v1584 = vpack.c.b16 %v1260, %v1254
    %v1585 = vpack.c.b16 %v1261, %v1255
    %v1586 = vpack.c.b16 %v1262, %v1256
    %v1587 = vpack.c.b16 %v1263, %v1257
    %v1588 = vpack.c.b16 %v1264, %v1258
    %v1589 = vpack.c.b16 %v1271, %v1265
    %v1590 = vpack.c.b16 %v1272, %v1266
    %v1591 = vpack.c.b16 %v1273, %v1267
    %v1592 = vpack.c.b16 %v1274, %v1268
    %v1593 = vpack.c.b16 %v1275, %v1269
    %v1594 = vpack.c.b16 %v1276, %v1270
    %v1595 = vpack.c.b16 %v1283, %v1277
    %v1596 = vpack.c.b16 %v1284, %v1278
    %v1597 = vpack.c.b16 %v1285, %v1279
    %v1598 = vpack.c.b16 %v1286, %v1280
    %v1599 = vpack.c.b16 %v1287, %v1281
    %v1600 = vpack.c.b16 %v1288, %v1282
    %v1601 = vpack.c.b16 %v1295, %v1289
    %v1602 = vpack.c.b16 %v1296, %v1290
    %v1603 = vpack.c.b16 %v1297, %v1291
    %v1604 = vpack.c.b16 %v1298, %v1292
    %v1605 = vpack.c.b16 %v1299, %v1293
    %v1606 = vpack.c.b16 %v1300, %v1294
    %v1607 = vpack.c.b16 %v1307, %v1301
    %v1608 = vpack.c.b16 %v1308, %v1302
    %v1609 = vpack.c.b16 %v1309, %v1303
    %v1610 = vpack.c.b16 %v1310, %v1304
    %v1611 = vpack.c.b16 %v1311, %v1305
    %v1612 = vpack.c.b16 %v1312, %v1306
    %v1613 = vpack.c.b16 %v1319, %v1313
    %v1614 = vpack.c.b16 %v1320, %v1314
    %v1615 = vpack.c.b16 %v1321, %v1315
    %v1616 = vpack.c.b16 %v1322, %v1316
    %v1617 = vpack.c.b16 %v1323, %v1317
    %v1618 = vpack.c.b16 %v1324, %v1318
    %v1619 = vpack.c.b16 %v1331, %v1325
    %v1620 = vpack.c.b16 %v1332, %v1326
    %v1621 = vpack.c.b16 %v1333, %v1327
    %v1622 = vpack.c.b16 %v1334, %v1328
    %v1623 = vpack.c.b16 %v1335, %v1329
    %v1624 = vpack.c.b16 %v1336, %v1330
    %1913 = vmatprep.subr.bf16.mxu0 %v1380
    %1914 = vmatpush1.bf16.msra.mxu0 %v1379
    %1915 = vmatprep.subr.bf16.mxu0 %v1374
    %1916 = vmatpush1.bf16.msra.mxu0 %v1373
    %1917 = vmatprep.subr.bf16.mxu0 %v1368
    %1918 = vmatpush1.bf16.msra.mxu0 %v1367
    %1919 = vmatprep.subr.bf16.mxu0 %v1362
    %1920 = vmatpush1.bf16.msra.mxu0 %v1361
    %1921 = vmatprep.subr.bf16.mxu0 %v1356
    %1922 = vmatpush1.bf16.msra.mxu0 %v1355
    %1923 = vmatprep.subr.bf16.mxu0 %v1350
    %1924 = vmatpush1.bf16.msra.mxu0 %v1349
    %1925 = vmatprep.subr.bf16.mxu0 %v1344
    %1926 = vmatpush1.bf16.msra.mxu0 %v1343
    %1927 = vmatprep.subr.bf16.mxu0 %v1338
    %1928 = vmatpush1.bf16.msra.mxu0 %v1337
    %1929 = vmatprep.subr.bf16.mxu0 %v1428
    %1930 = vmatpush2.bf16.msra.mxu0 %v1427
    %1931 = vmatprep.subr.bf16.mxu0 %v1422
    %1932 = vmatpush2.bf16.msra.mxu0 %v1421
    %1933 = vmatprep.subr.bf16.mxu0 %v1416
    %1934 = vmatpush2.bf16.msra.mxu0 %v1415
    %1935 = vmatprep.subr.bf16.mxu0 %v1410
    %1936 = vmatpush2.bf16.msra.mxu0 %v1409
    %1937 = vmatprep.subr.bf16.mxu0 %v1404
    %1938 = vmatpush2.bf16.msra.mxu0 %v1403
    %1939 = vmatprep.subr.bf16.mxu0 %v1398
    %1940 = vmatpush2.bf16.msra.mxu0 %v1397
    %1941 = vmatprep.subr.bf16.mxu0 %v1392
    %1942 = vmatpush2.bf16.msra.mxu0 %v1391
    %1943 = vmatprep.subr.bf16.mxu0 %v1386
    %1944 = vmatpush2.bf16.msra.mxu0 %v1385
    %1945 = vmatprep.mubr.bf16.mxu0 %v462
    %1946 = vmatmul.mubr.bf16.gmra.mxu0 %v461
    %v1947 = vpop.f32.mrf.mxu0
    %v1948 = vadd.f32 %v416, %v1947
    %v1949 = vpop.f32.mrf.mxu0
    %v1950 = vadd.f32 %v420, %v1949
    %v1951 = vpop.f32.mrf.mxu0
    %v1952 = vadd.f32 %v416, %v1951
    %v1953 = vpop.f32.mrf.mxu0
    %v1954 = vadd.f32 %v420, %v1953
    %1955 = vdwg.mxu0
    %1956 = vmatprep.subr.bf16.mxu0 %v1476
    %1957 = vmatpush1.bf16.msra.mxu0 %v1475
    %1958 = vmatprep.subr.bf16.mxu0 %v1470
    %1959 = vmatpush1.bf16.msra.mxu0 %v1469
    %1960 = vmatprep.subr.bf16.mxu0 %v1464
    %1961 = vmatpush1.bf16.msra.mxu0 %v1463
    %1962 = vmatprep.subr.bf16.mxu0 %v1458
    %1963 = vmatpush1.bf16.msra.mxu0 %v1457
    %1964 = vmatprep.subr.bf16.mxu0 %v1452
    %1965 = vmatpush1.bf16.msra.mxu0 %v1451
    %1966 = vmatprep.subr.bf16.mxu0 %v1446
    %1967 = vmatpush1.bf16.msra.mxu0 %v1445
    %1968 = vmatprep.subr.bf16.mxu0 %v1440
    %1969 = vmatpush1.bf16.msra.mxu0 %v1439
    %1970 = vmatprep.subr.bf16.mxu0 %v1434
    %1971 = vmatpush1.bf16.msra.mxu0 %v1433
    %1972 = vmatprep.subr.bf16.mxu0 %v1524
    %1973 = vmatpush2.bf16.msra.mxu0 %v1523
    %1974 = vmatprep.subr.bf16.mxu0 %v1518
    %1975 = vmatpush2.bf16.msra.mxu0 %v1517
    %1976 = vmatprep.subr.bf16.mxu0 %v1512
    %1977 = vmatpush2.bf16.msra.mxu0 %v1511
    %1978 = vmatprep.subr.bf16.mxu0 %v1506
    %1979 = vmatpush2.bf16.msra.mxu0 %v1505
    %1980 = vmatprep.subr.bf16.mxu0 %v1500
    %1981 = vmatpush2.bf16.msra.mxu0 %v1499
    %1982 = vmatprep.subr.bf16.mxu0 %v1494
    %1983 = vmatpush2.bf16.msra.mxu0 %v1493
    %1984 = vmatprep.subr.bf16.mxu0 %v1488
    %1985 = vmatpush2.bf16.msra.mxu0 %v1487
    %1986 = vmatprep.subr.bf16.mxu0 %v1482
    %1987 = vmatpush2.bf16.msra.mxu0 %v1481
    %1988 = vmatprep.mubr.bf16.mxu0 %v464
    %1989 = vmatmul.mubr.bf16.gmra.mxu0 %v463
    %v1990 = vpop.f32.mrf.mxu0
    %v1991 = vadd.f32 %v1948, %v1990
    %v1992 = vpop.f32.mrf.mxu0
    %v1993 = vadd.f32 %v1950, %v1992
    %v1994 = vpop.f32.mrf.mxu0
    %v1995 = vadd.f32 %v1952, %v1994
    %v1996 = vpop.f32.mrf.mxu0
    %v1997 = vadd.f32 %v1954, %v1996
    %1998 = vdwg.mxu0
    %1999 = vmatprep.subr.bf16.mxu0 %v1572
    %2000 = vmatpush1.bf16.msra.mxu0 %v1571
    %2001 = vmatprep.subr.bf16.mxu0 %v1566
    %2002 = vmatpush1.bf16.msra.mxu0 %v1565
    %2003 = vmatprep.subr.bf16.mxu0 %v1560
    %2004 = vmatpush1.bf16.msra.mxu0 %v1559
    %2005 = vmatprep.subr.bf16.mxu0 %v1554
    %2006 = vmatpush1.bf16.msra.mxu0 %v1553
    %2007 = vmatprep.subr.bf16.mxu0 %v1548
    %2008 = vmatpush1.bf16.msra.mxu0 %v1547
    %2009 = vmatprep.subr.bf16.mxu0 %v1542
    %2010 = vmatpush1.bf16.msra.mxu0 %v1541
    %2011 = vmatprep.subr.bf16.mxu0 %v1536
    %2012 = vmatpush1.bf16.msra.mxu0 %v1535
    %2013 = vmatprep.subr.bf16.mxu0 %v1530
    %2014 = vmatpush1.bf16.msra.mxu0 %v1529
    %2015 = vmatprep.subr.bf16.mxu0 %v1620
    %2016 = vmatpush2.bf16.msra.mxu0 %v1619
    %2017 = vmatprep.subr.bf16.mxu0 %v1614
    %2018 = vmatpush2.bf16.msra.mxu0 %v1613
    %2019 = vmatprep.subr.bf16.mxu0 %v1608
    %2020 = vmatpush2.bf16.msra.mxu0 %v1607
    %2021 = vmatprep.subr.bf16.mxu0 %v1602
    %2022 = vmatpush2.bf16.msra.mxu0 %v1601
    %2023 = vmatprep.subr.bf16.mxu0 %v1596
    %2024 = vmatpush2.bf16.msra.mxu0 %v1595
    %2025 = vmatprep.subr.bf16.mxu0 %v1590
    %2026 = vmatpush2.bf16.msra.mxu0 %v1589
    %2027 = vmatprep.subr.bf16.mxu0 %v1584
    %2028 = vmatpush2.bf16.msra.mxu0 %v1583
    %2029 = vmatprep.subr.bf16.mxu0 %v1578
    %2030 = vmatpush2.bf16.msra.mxu0 %v1577
    %2031 = vmatprep.mubr.bf16.mxu0 %v466
    %2032 = vmatmul.mubr.bf16.gmra.mxu0 %v465
    %v2033 = vpop.f32.mrf.mxu0
    %v2034 = vadd.f32 %v1991, %v2033
    %v2035 = vpop.f32.mrf.mxu0
    %v2036 = vadd.f32 %v1993, %v2035
    %v2037 = vpop.f32.mrf.mxu0
    %v2038 = vadd.f32 %v1995, %v2037
    %v2039 = vpop.f32.mrf.mxu0
    %v2040 = vadd.f32 %v1997, %v2039
    %2041 = vdwg.mxu0
    %2042 = vmatprep.subr.bf16.mxu0 %v1382
    %2043 = vmatpush1.bf16.msra.mxu0 %v1381
    %2044 = vmatprep.subr.bf16.mxu0 %v1376
    %2045 = vmatpush1.bf16.msra.mxu0 %v1375
    %2046 = vmatprep.subr.bf16.mxu0 %v1370
    %2047 = vmatpush1.bf16.msra.mxu0 %v1369
    %2048 = vmatprep.subr.bf16.mxu0 %v1364
    %2049 = vmatpush1.bf16.msra.mxu0 %v1363
    %2050 = vmatprep.subr.bf16.mxu0 %v1358
    %2051 = vmatpush1.bf16.msra.mxu0 %v1357
    %2052 = vmatprep.subr.bf16.mxu0 %v1352
    %2053 = vmatpush1.bf16.msra.mxu0 %v1351
    %2054 = vmatprep.subr.bf16.mxu0 %v1346
    %2055 = vmatpush1.bf16.msra.mxu0 %v1345
    %2056 = vmatprep.subr.bf16.mxu0 %v1340
    %2057 = vmatpush1.bf16.msra.mxu0 %v1339
    %2058 = vmatprep.subr.bf16.mxu0 %v1430
    %2059 = vmatpush2.bf16.msra.mxu0 %v1429
    %2060 = vmatprep.subr.bf16.mxu0 %v1424
    %2061 = vmatpush2.bf16.msra.mxu0 %v1423
    %2062 = vmatprep.subr.bf16.mxu0 %v1418
    %2063 = vmatpush2.bf16.msra.mxu0 %v1417
    %2064 = vmatprep.subr.bf16.mxu0 %v1412
    %2065 = vmatpush2.bf16.msra.mxu0 %v1411
    %2066 = vmatprep.subr.bf16.mxu0 %v1406
    %2067 = vmatpush2.bf16.msra.mxu0 %v1405
    %2068 = vmatprep.subr.bf16.mxu0 %v1400
    %2069 = vmatpush2.bf16.msra.mxu0 %v1399
    %2070 = vmatprep.subr.bf16.mxu0 %v1394
    %2071 = vmatpush2.bf16.msra.mxu0 %v1393
    %2072 = vmatprep.subr.bf16.mxu0 %v1388
    %2073 = vmatpush2.bf16.msra.mxu0 %v1387
    %2074 = vmatprep.mubr.bf16.mxu0 %v462
    %2075 = vmatmul.mubr.bf16.gmra.mxu0 %v461
    %v2076 = vpop.f32.mrf.mxu0
    %v2077 = vadd.f32 %v424, %v2076
    %v2078 = vpop.f32.mrf.mxu0
    %v2079 = vadd.f32 %v428, %v2078
    %v2080 = vpop.f32.mrf.mxu0
    %v2081 = vadd.f32 %v424, %v2080
    %v2082 = vpop.f32.mrf.mxu0
    %v2083 = vadd.f32 %v428, %v2082
    %2084 = vdwg.mxu0
    %2085 = vmatprep.subr.bf16.mxu0 %v1478
    %2086 = vmatpush1.bf16.msra.mxu0 %v1477
    %2087 = vmatprep.subr.bf16.mxu0 %v1472
    %2088 = vmatpush1.bf16.msra.mxu0 %v1471
    %2089 = vmatprep.subr.bf16.mxu0 %v1466
    %2090 = vmatpush1.bf16.msra.mxu0 %v1465
    %2091 = vmatprep.subr.bf16.mxu0 %v1460
    %2092 = vmatpush1.bf16.msra.mxu0 %v1459
    %2093 = vmatprep.subr.bf16.mxu0 %v1454
    %2094 = vmatpush1.bf16.msra.mxu0 %v1453
    %2095 = vmatprep.subr.bf16.mxu0 %v1448
    %2096 = vmatpush1.bf16.msra.mxu0 %v1447
    %2097 = vmatprep.subr.bf16.mxu0 %v1442
    %2098 = vmatpush1.bf16.msra.mxu0 %v1441
    %2099 = vmatprep.subr.bf16.mxu0 %v1436
    %2100 = vmatpush1.bf16.msra.mxu0 %v1435
    %2101 = vmatprep.subr.bf16.mxu0 %v1526
    %2102 = vmatpush2.bf16.msra.mxu0 %v1525
    %2103 = vmatprep.subr.bf16.mxu0 %v1520
    %2104 = vmatpush2.bf16.msra.mxu0 %v1519
    %2105 = vmatprep.subr.bf16.mxu0 %v1514
    %2106 = vmatpush2.bf16.msra.mxu0 %v1513
    %2107 = vmatprep.subr.bf16.mxu0 %v1508
    %2108 = vmatpush2.bf16.msra.mxu0 %v1507
    %2109 = vmatprep.subr.bf16.mxu0 %v1502
    %2110 = vmatpush2.bf16.msra.mxu0 %v1501
    %2111 = vmatprep.subr.bf16.mxu0 %v1496
    %2112 = vmatpush2.bf16.msra.mxu0 %v1495
    %2113 = vmatprep.subr.bf16.mxu0 %v1490
    %2114 = vmatpush2.bf16.msra.mxu0 %v1489
    %2115 = vmatprep.subr.bf16.mxu0 %v1484
    %2116 = vmatpush2.bf16.msra.mxu0 %v1483
    %2117 = vmatprep.mubr.bf16.mxu0 %v464
    %2118 = vmatmul.mubr.bf16.gmra.mxu0 %v463
    %v2119 = vpop.f32.mrf.mxu0
    %v2120 = vadd.f32 %v2077, %v2119
    %v2121 = vpop.f32.mrf.mxu0
    %v2122 = vadd.f32 %v2079, %v2121
    %v2123 = vpop.f32.mrf.mxu0
    %v2124 = vadd.f32 %v2081, %v2123
    %v2125 = vpop.f32.mrf.mxu0
    %v2126 = vadd.f32 %v2083, %v2125
    %2127 = vdwg.mxu0
    %2128 = vmatprep.subr.bf16.mxu0 %v1574
    %2129 = vmatpush1.bf16.msra.mxu0 %v1573
    %2130 = vmatprep.subr.bf16.mxu0 %v1568
    %2131 = vmatpush1.bf16.msra.mxu0 %v1567
    %2132 = vmatprep.subr.bf16.mxu0 %v1562
    %2133 = vmatpush1.bf16.msra.mxu0 %v1561
    %2134 = vmatprep.subr.bf16.mxu0 %v1556
    %2135 = vmatpush1.bf16.msra.mxu0 %v1555
    %2136 = vmatprep.subr.bf16.mxu0 %v1550
    %2137 = vmatpush1.bf16.msra.mxu0 %v1549
    %2138 = vmatprep.subr.bf16.mxu0 %v1544
    %2139 = vmatpush1.bf16.msra.mxu0 %v1543
    %2140 = vmatprep.subr.bf16.mxu0 %v1538
    %2141 = vmatpush1.bf16.msra.mxu0 %v1537
    %2142 = vmatprep.subr.bf16.mxu0 %v1532
    %2143 = vmatpush1.bf16.msra.mxu0 %v1531
    %2144 = vmatprep.subr.bf16.mxu0 %v1622
    %2145 = vmatpush2.bf16.msra.mxu0 %v1621
    %2146 = vmatprep.subr.bf16.mxu0 %v1616
    %2147 = vmatpush2.bf16.msra.mxu0 %v1615
    %2148 = vmatprep.subr.bf16.mxu0 %v1610
    %2149 = vmatpush2.bf16.msra.mxu0 %v1609
    %2150 = vmatprep.subr.bf16.mxu0 %v1604
    %2151 = vmatpush2.bf16.msra.mxu0 %v1603
    %2152 = vmatprep.subr.bf16.mxu0 %v1598
    %2153 = vmatpush2.bf16.msra.mxu0 %v1597
    %2154 = vmatprep.subr.bf16.mxu0 %v1592
    %2155 = vmatpush2.bf16.msra.mxu0 %v1591
    %2156 = vmatprep.subr.bf16.mxu0 %v1586
    %2157 = vmatpush2.bf16.msra.mxu0 %v1585
    %2158 = vmatprep.subr.bf16.mxu0 %v1580
    %2159 = vmatpush2.bf16.msra.mxu0 %v1579
    %2160 = vmatprep.mubr.bf16.mxu0 %v466
    %2161 = vmatmul.mubr.bf16.gmra.mxu0 %v465
    %v2162 = vpop.f32.mrf.mxu0
    %v2163 = vadd.f32 %v2120, %v2162
    %v2164 = vpop.f32.mrf.mxu0
    %v2165 = vadd.f32 %v2122, %v2164
    %v2166 = vpop.f32.mrf.mxu0
    %v2167 = vadd.f32 %v2124, %v2166
    %v2168 = vpop.f32.mrf.mxu0
    %v2169 = vadd.f32 %v2126, %v2168
    %2170 = vdwg.mxu0
    %2171 = vmatprep.subr.bf16.mxu0 %v1384
    %2172 = vmatpush1.bf16.msra.mxu0 %v1383
    %2173 = vmatprep.subr.bf16.mxu0 %v1378
    %2174 = vmatpush1.bf16.msra.mxu0 %v1377
    %2175 = vmatprep.subr.bf16.mxu0 %v1372
    %2176 = vmatpush1.bf16.msra.mxu0 %v1371
    %2177 = vmatprep.subr.bf16.mxu0 %v1366
    %2178 = vmatpush1.bf16.msra.mxu0 %v1365
    %2179 = vmatprep.subr.bf16.mxu0 %v1360
    %2180 = vmatpush1.bf16.msra.mxu0 %v1359
    %2181 = vmatprep.subr.bf16.mxu0 %v1354
    %2182 = vmatpush1.bf16.msra.mxu0 %v1353
    %2183 = vmatprep.subr.bf16.mxu0 %v1348
    %2184 = vmatpush1.bf16.msra.mxu0 %v1347
    %2185 = vmatprep.subr.bf16.mxu0 %v1342
    %2186 = vmatpush1.bf16.msra.mxu0 %v1341
    %2187 = vmatprep.subr.bf16.mxu0 %v1432
    %2188 = vmatpush2.bf16.msra.mxu0 %v1431
    %2189 = vmatprep.subr.bf16.mxu0 %v1426
    %2190 = vmatpush2.bf16.msra.mxu0 %v1425
    %2191 = vmatprep.subr.bf16.mxu0 %v1420
    %2192 = vmatpush2.bf16.msra.mxu0 %v1419
    %2193 = vmatprep.subr.bf16.mxu0 %v1414
    %2194 = vmatpush2.bf16.msra.mxu0 %v1413
    %2195 = vmatprep.subr.bf16.mxu0 %v1408
    %2196 = vmatpush2.bf16.msra.mxu0 %v1407
    %2197 = vmatprep.subr.bf16.mxu0 %v1402
    %2198 = vmatpush2.bf16.msra.mxu0 %v1401
    %2199 = vmatprep.subr.bf16.mxu0 %v1396
    %2200 = vmatpush2.bf16.msra.mxu0 %v1395
    %2201 = vmatprep.subr.bf16.mxu0 %v1390
    %2202 = vmatpush2.bf16.msra.mxu0 %v1389
    %2203 = vmatprep.mubr.bf16.mxu0 %v462
    %2204 = vmatmul.mubr.bf16.gmra.mxu0 %v461
    %v2205 = vpop.f32.mrf.mxu0
    %v2206 = vadd.f32 %v432, %v2205
    %v2207 = vpop.f32.mrf.mxu0
    %v2208 = vadd.f32 %v436, %v2207
    %v2209 = vpop.f32.mrf.mxu0
    %v2210 = vadd.f32 %v432, %v2209
    %v2211 = vpop.f32.mrf.mxu0
    %v2212 = vadd.f32 %v436, %v2211
    %2213 = vdwg.mxu0
    %2214 = vmatprep.subr.bf16.mxu0 %v1480
    %2215 = vmatpush1.bf16.msra.mxu0 %v1479
    %2216 = vmatprep.subr.bf16.mxu0 %v1474
    %2217 = vmatpush1.bf16.msra.mxu0 %v1473
    %2218 = vmatprep.subr.bf16.mxu0 %v1468
    %2219 = vmatpush1.bf16.msra.mxu0 %v1467
    %2220 = vmatprep.subr.bf16.mxu0 %v1462
    %2221 = vmatpush1.bf16.msra.mxu0 %v1461
    %2222 = vmatprep.subr.bf16.mxu0 %v1456
    %2223 = vmatpush1.bf16.msra.mxu0 %v1455
    %2224 = vmatprep.subr.bf16.mxu0 %v1450
    %2225 = vmatpush1.bf16.msra.mxu0 %v1449
    %2226 = vmatprep.subr.bf16.mxu0 %v1444
    %2227 = vmatpush1.bf16.msra.mxu0 %v1443
    %2228 = vmatprep.subr.bf16.mxu0 %v1438
    %2229 = vmatpush1.bf16.msra.mxu0 %v1437
    %2230 = vmatprep.subr.bf16.mxu0 %v1528
    %2231 = vmatpush2.bf16.msra.mxu0 %v1527
    %2232 = vmatprep.subr.bf16.mxu0 %v1522
    %2233 = vmatpush2.bf16.msra.mxu0 %v1521
    %2234 = vmatprep.subr.bf16.mxu0 %v1516
    %2235 = vmatpush2.bf16.msra.mxu0 %v1515
    %2236 = vmatprep.subr.bf16.mxu0 %v1510
    %2237 = vmatpush2.bf16.msra.mxu0 %v1509
    %2238 = vmatprep.subr.bf16.mxu0 %v1504
    %2239 = vmatpush2.bf16.msra.mxu0 %v1503
    %2240 = vmatprep.subr.bf16.mxu0 %v1498
    %2241 = vmatpush2.bf16.msra.mxu0 %v1497
    %2242 = vmatprep.subr.bf16.mxu0 %v1492
    %2243 = vmatpush2.bf16.msra.mxu0 %v1491
    %2244 = vmatprep.subr.bf16.mxu0 %v1486
    %2245 = vmatpush2.bf16.msra.mxu0 %v1485
    %2246 = vmatprep.mubr.bf16.mxu0 %v464
    %2247 = vmatmul.mubr.bf16.gmra.mxu0 %v463
    %v2248 = vpop.f32.mrf.mxu0
    %v2249 = vadd.f32 %v2206, %v2248
    %v2250 = vpop.f32.mrf.mxu0
    %v2251 = vadd.f32 %v2208, %v2250
    %v2252 = vpop.f32.mrf.mxu0
    %v2253 = vadd.f32 %v2210, %v2252
    %v2254 = vpop.f32.mrf.mxu0
    %v2255 = vadd.f32 %v2212, %v2254
    %2256 = vdwg.mxu0
    %2257 = vmatprep.subr.bf16.mxu0 %v1576
    %2258 = vmatpush1.bf16.msra.mxu0 %v1575
    %2259 = vmatprep.subr.bf16.mxu0 %v1570
    %2260 = vmatpush1.bf16.msra.mxu0 %v1569
    %2261 = vmatprep.subr.bf16.mxu0 %v1564
    %2262 = vmatpush1.bf16.msra.mxu0 %v1563
    %2263 = vmatprep.subr.bf16.mxu0 %v1558
    %2264 = vmatpush1.bf16.msra.mxu0 %v1557
    %2265 = vmatprep.subr.bf16.mxu0 %v1552
    %2266 = vmatpush1.bf16.msra.mxu0 %v1551
    %2267 = vmatprep.subr.bf16.mxu0 %v1546
    %2268 = vmatpush1.bf16.msra.mxu0 %v1545
    %2269 = vmatprep.subr.bf16.mxu0 %v1540
    %2270 = vmatpush1.bf16.msra.mxu0 %v1539
    %2271 = vmatprep.subr.bf16.mxu0 %v1534
    %2272 = vmatpush1.bf16.msra.mxu0 %v1533
    %2273 = vmatprep.subr.bf16.mxu0 %v1624
    %2274 = vmatpush2.bf16.msra.mxu0 %v1623
    %2275 = vmatprep.subr.bf16.mxu0 %v1618
    %2276 = vmatpush2.bf16.msra.mxu0 %v1617
    %2277 = vmatprep.subr.bf16.mxu0 %v1612
    %2278 = vmatpush2.bf16.msra.mxu0 %v1611
    %2279 = vmatprep.subr.bf16.mxu0 %v1606
    %2280 = vmatpush2.bf16.msra.mxu0 %v1605
    %2281 = vmatprep.subr.bf16.mxu0 %v1600
    %2282 = vmatpush2.bf16.msra.mxu0 %v1599
    %2283 = vmatprep.subr.bf16.mxu0 %v1594
    %2284 = vmatpush2.bf16.msra.mxu0 %v1593
    %2285 = vmatprep.subr.bf16.mxu0 %v1588
    %2286 = vmatpush2.bf16.msra.mxu0 %v1587
    %2287 = vmatprep.subr.bf16.mxu0 %v1582
    %2288 = vmatpush2.bf16.msra.mxu0 %v1581
    %2289 = vmatprep.mubr.bf16.mxu0 %v466
    %2290 = vmatmul.mubr.bf16.gmra.mxu0 %v465
    %v2291 = vpop.f32.mrf.mxu0
    %v2292 = vadd.f32 %v2249, %v2291
    %v2293 = vpop.f32.mrf.mxu0
    %v2294 = vadd.f32 %v2251, %v2293
    %v2295 = vpop.f32.mrf.mxu0
    %v2296 = vadd.f32 %v2253, %v2295
    %v2297 = vpop.f32.mrf.mxu0
    %v2298 = vadd.f32 %v2255, %v2297
    %2299 = vdwg.mxu0
    %v2300 = vtanh.pop %v2034
    %v2301 = vtanh.pop %v2036
    %v2302 = vtanh.pop %v2163
    %v2303 = vtanh.pop %v2165
    %v2304 = vtanh.pop %v2292
    %v2305 = vtanh.pop %v2294
    %v2306 = vtanh.pop %v2038
    %v2307 = vtanh.pop %v2040
    %v2308 = vtanh.pop %v2167
    %v2309 = vtanh.pop %v2169
    %v2310 = vtanh.pop %v2296
    %v2311 = vtanh.pop %v2298
    %v2312 = vpack.c.bf16 %v2306, %v2300
    %v2313 = vpack.c.bf16 %v2307, %v2301
    %v2314 = vpack.c.bf16 %v2308, %v2302
    %v2315 = vpack.c.bf16 %v2309, %v2303
    %v2316 = vpack.c.bf16 %v2310, %v2304
    %v2317 = vpack.c.bf16 %v2311, %v2305
    %v2318 = vld [vmem:[#allocation8] sm:$0xf]
    %v2319 = vld [vmem:[#allocation8 + $0x4] sm:$0xf]
    %v2320 = vld [vmem:[#allocation8 + $0x8] sm:$0xf]
    %v2321 = vld [vmem:[#allocation8 + $0xc] sm:$0xf]
    %v2322 = vld [vmem:[#allocation8 + $0x10] sm:$0xf]
    %v2323 = vld [vmem:[#allocation8 + $0x14] sm:$0xf]
    %v2324 = vld [vmem:[#allocation8 + $0x18] sm:$0xf]
    %v2325 = vld [vmem:[#allocation8 + $0x1c] sm:$0xf]
    %v2326 = vld [vmem:[#allocation8 + $0x20] sm:$0xf]
    %v2327 = vld [vmem:[#allocation8 + $0x24] sm:$0xf]
    %v2328 = vld [vmem:[#allocation8 + $0x28] sm:$0xf]
    %v2329 = vld [vmem:[#allocation8 + $0x2c] sm:$0xf]
    %v2330 = vld [vmem:[#allocation8 + $0x30] sm:$0xf]
    %v2331 = vld [vmem:[#allocation8 + $0x34] sm:$0xf]
    %v2332 = vld [vmem:[#allocation8 + $0x38] sm:$0xf]
    %v2333 = vld [vmem:[#allocation8 + $0x3c] sm:$0xf]
    %v2334 = vld [vmem:[#allocation8 + $0x40] sm:$0xf]
    %v2335 = vld [vmem:[#allocation8 + $0x44] sm:$0xf]
    %v2336 = vld [vmem:[#allocation8 + $0x48] sm:$0xf]
    %v2337 = vld [vmem:[#allocation8 + $0x4c] sm:$0xf]
    %v2338 = vld [vmem:[#allocation8 + $0x50] sm:$0xf]
    %v2339 = vld [vmem:[#allocation8 + $0x54] sm:$0xf]
    %v2340 = vld [vmem:[#allocation8 + $0x58] sm:$0xf]
    %v2341 = vld [vmem:[#allocation8 + $0x5c] sm:$0xf]
    %v2342 = vld [vmem:[#allocation8 + $0x60] sm:$0xf]
    %v2343 = vld [vmem:[#allocation8 + $0x64] sm:$0xf]
    %v2344 = vld [vmem:[#allocation8 + $0x68] sm:$0xf]
    %v2345 = vld [vmem:[#allocation8 + $0x6c] sm:$0xf]
    %v2346 = vld [vmem:[#allocation8 + $0x70] sm:$0xf]
    %v2347 = vld [vmem:[#allocation8 + $0x74] sm:$0xf]
    %v2348 = vld [vmem:[#allocation8 + $0x78] sm:$0xf]
    %v2349 = vld [vmem:[#allocation8 + $0x7c] sm:$0xf]
    %v2350 = vld [vmem:[#allocation8 + $0x80] sm:$0xf]
    %v2351 = vld [vmem:[#allocation8 + $0x84] sm:$0xf]
    %v2352 = vld [vmem:[#allocation8 + $0x88] sm:$0xf]
    %v2353 = vld [vmem:[#allocation8 + $0x8c] sm:$0xf]
    %v2354 = vld [vmem:[#allocation8 + $0x90] sm:$0xf]
    %v2355 = vld [vmem:[#allocation8 + $0x94] sm:$0xf]
    %v2356 = vld [vmem:[#allocation8 + $0x98] sm:$0xf]
    %v2357 = vld [vmem:[#allocation8 + $0x9c] sm:$0xf]
    %v2358 = vld [vmem:[#allocation8 + $0xa0] sm:$0xf]
    %v2359 = vld [vmem:[#allocation8 + $0xa4] sm:$0xf]
    %v2360 = vld [vmem:[#allocation8 + $0xa8] sm:$0xf]
    %v2361 = vld [vmem:[#allocation8 + $0xac] sm:$0xf]
    %v2362 = vld [vmem:[#allocation8 + $0xb0] sm:$0xf]
    %v2363 = vld [vmem:[#allocation8 + $0xb4] sm:$0xf]
    %v2364 = vld [vmem:[#allocation8 + $0xb8] sm:$0xf]
    %v2365 = vld [vmem:[#allocation8 + $0xbc] sm:$0xf]
    %v2366 = vld [vmem:[#allocation8 + $0xc0] sm:$0xf]
    %v2367 = vld [vmem:[#allocation8 + $0xc4] sm:$0xf]
    %v2368 = vld [vmem:[#allocation8 + $0xc8] sm:$0xf]
    %v2369 = vld [vmem:[#allocation8 + $0xcc] sm:$0xf]
    %v2370 = vld [vmem:[#allocation8 + $0xd0] sm:$0xf]
    %v2371 = vld [vmem:[#allocation8 + $0xd4] sm:$0xf]
    %v2372 = vld [vmem:[#allocation8 + $0xd8] sm:$0xf]
    %v2373 = vld [vmem:[#allocation8 + $0xdc] sm:$0xf]
    %v2374 = vld [vmem:[#allocation8 + $0xe0] sm:$0xf]
    %v2375 = vld [vmem:[#allocation8 + $0xe4] sm:$0xf]
    %v2376 = vld [vmem:[#allocation8 + $0xe8] sm:$0xf]
    %v2377 = vld [vmem:[#allocation8 + $0xec] sm:$0xf]
    %v2378 = vld [vmem:[#allocation8 + $0xf0] sm:$0xf]
    %v2379 = vld [vmem:[#allocation8 + $0xf4] sm:$0xf]
    %v2380 = vld [vmem:[#allocation8 + $0xf8] sm:$0xf]
    %v2381 = vld [vmem:[#allocation8 + $0xfc] sm:$0xf]
    %v2382 = vld [vmem:[#allocation8 + $0x100] sm:$0xf]
    %v2383 = vld [vmem:[#allocation8 + $0x104] sm:$0xf]
    %v2384 = vld [vmem:[#allocation8 + $0x108] sm:$0xf]
    %v2385 = vld [vmem:[#allocation8 + $0x10c] sm:$0xf]
    %v2386 = vld [vmem:[#allocation8 + $0x110] sm:$0xf]
    %v2387 = vld [vmem:[#allocation8 + $0x114] sm:$0xf]
    %v2388 = vld [vmem:[#allocation8 + $0x118] sm:$0xf]
    %v2389 = vld [vmem:[#allocation8 + $0x11c] sm:$0xf]
    %v2390 = vld [vmem:[#allocation8 + $0x120] sm:$0xf]
    %v2391 = vld [vmem:[#allocation8 + $0x124] sm:$0xf]
    %v2392 = vld [vmem:[#allocation8 + $0x128] sm:$0xf]
    %v2393 = vld [vmem:[#allocation8 + $0x12c] sm:$0xf]
    %v2394 = vld [vmem:[#allocation8 + $0x130] sm:$0xf]
    %v2395 = vld [vmem:[#allocation8 + $0x134] sm:$0xf]
    %v2396 = vld [vmem:[#allocation8 + $0x138] sm:$0xf]
    %v2397 = vld [vmem:[#allocation8 + $0x13c] sm:$0xf]
    %v2398 = vld [vmem:[#allocation8 + $0x140] sm:$0xf]
    %v2399 = vld [vmem:[#allocation8 + $0x144] sm:$0xf]
    %v2400 = vld [vmem:[#allocation8 + $0x148] sm:$0xf]
    %v2401 = vld [vmem:[#allocation8 + $0x14c] sm:$0xf]
    %v2402 = vld [vmem:[#allocation8 + $0x150] sm:$0xf]
    %v2403 = vld [vmem:[#allocation8 + $0x154] sm:$0xf]
    %v2404 = vld [vmem:[#allocation8 + $0x158] sm:$0xf]
    %v2405 = vld [vmem:[#allocation8 + $0x15c] sm:$0xf]
    %v2406 = vld [vmem:[#allocation8 + $0x160] sm:$0xf]
    %v2407 = vld [vmem:[#allocation8 + $0x164] sm:$0xf]
    %v2408 = vld [vmem:[#allocation8 + $0x168] sm:$0xf]
    %v2409 = vld [vmem:[#allocation8 + $0x16c] sm:$0xf]
    %v2410 = vld [vmem:[#allocation8 + $0x170] sm:$0xf]
    %v2411 = vld [vmem:[#allocation8 + $0x174] sm:$0xf]
    %v2412 = vld [vmem:[#allocation8 + $0x178] sm:$0xf]
    %v2413 = vld [vmem:[#allocation8 + $0x17c] sm:$0xf]
    %v2414 = vld [vmem:[#allocation10] sm:$0x1]
    %v2416 = vlaneseq
    %v2417 = vshrl.u32 %v2416, 7
    %v2418 = vsub.s32 0, %v2417
    %v2419 = vrot.slane %v2414, %v2418
    %v2517 = vunpack.c.l.b16 %v2318
    %v2518 = vunpack.c.l.b16 %v2319
    %v2519 = vunpack.c.l.b16 %v2320
    %v2520 = vunpack.c.l.b16 %v2321
    %v2521 = vunpack.c.l.b16 %v2322
    %v2522 = vunpack.c.l.b16 %v2323
    %v2523 = vunpack.c.l.b16 %v2324
    %v2524 = vunpack.c.l.b16 %v2325
    %v2525 = vunpack.c.l.b16 %v2326
    %v2526 = vunpack.c.l.b16 %v2327
    %v2527 = vunpack.c.l.b16 %v2328
    %v2528 = vunpack.c.l.b16 %v2329
    %v2529 = vunpack.c.l.b16 %v2330
    %v2530 = vunpack.c.l.b16 %v2331
    %v2531 = vunpack.c.l.b16 %v2332
    %v2532 = vunpack.c.l.b16 %v2333
    %v2533 = vunpack.c.l.b16 %v2334
    %v2534 = vunpack.c.l.b16 %v2335
    %v2535 = vunpack.c.l.b16 %v2336
    %v2536 = vunpack.c.l.b16 %v2337
    %v2537 = vunpack.c.l.b16 %v2338
    %v2538 = vunpack.c.l.b16 %v2339
    %v2539 = vunpack.c.l.b16 %v2340
    %v2540 = vunpack.c.l.b16 %v2341
    %v2541 = vunpack.c.l.b16 %v2342
    %v2542 = vunpack.c.l.b16 %v2343
    %v2543 = vunpack.c.l.b16 %v2344
    %v2544 = vunpack.c.l.b16 %v2345
    %v2545 = vunpack.c.l.b16 %v2346
    %v2546 = vunpack.c.l.b16 %v2347
    %v2547 = vunpack.c.l.b16 %v2348
    %v2548 = vunpack.c.l.b16 %v2349
    %v2549 = vunpack.c.l.b16 %v2350
    %v2550 = vunpack.c.l.b16 %v2351
    %v2551 = vunpack.c.l.b16 %v2352
    %v2552 = vunpack.c.l.b16 %v2353
    %v2553 = vunpack.c.l.b16 %v2354
    %v2554 = vunpack.c.l.b16 %v2355
    %v2555 = vunpack.c.l.b16 %v2356
    %v2556 = vunpack.c.l.b16 %v2357
    %v2557 = vunpack.c.l.b16 %v2358
    %v2558 = vunpack.c.l.b16 %v2359
    %v2559 = vunpack.c.l.b16 %v2360
    %v2560 = vunpack.c.l.b16 %v2361
    %v2561 = vunpack.c.l.b16 %v2362
    %v2562 = vunpack.c.l.b16 %v2363
    %v2563 = vunpack.c.l.b16 %v2364
    %v2564 = vunpack.c.l.b16 %v2365
    %v2565 = vunpack.c.l.b16 %v2366
    %v2566 = vunpack.c.l.b16 %v2367
    %v2567 = vunpack.c.l.b16 %v2368
    %v2568 = vunpack.c.l.b16 %v2369
    %v2569 = vunpack.c.l.b16 %v2370
    %v2570 = vunpack.c.l.b16 %v2371
    %v2571 = vunpack.c.l.b16 %v2372
    %v2572 = vunpack.c.l.b16 %v2373
    %v2573 = vunpack.c.l.b16 %v2374
    %v2574 = vunpack.c.l.b16 %v2375
    %v2575 = vunpack.c.l.b16 %v2376
    %v2576 = vunpack.c.l.b16 %v2377
    %v2577 = vunpack.c.l.b16 %v2378
    %v2578 = vunpack.c.l.b16 %v2379
    %v2579 = vunpack.c.l.b16 %v2380
    %v2580 = vunpack.c.l.b16 %v2381
    %v2581 = vunpack.c.l.b16 %v2382
    %v2582 = vunpack.c.l.b16 %v2383
    %v2583 = vunpack.c.l.b16 %v2384
    %v2584 = vunpack.c.l.b16 %v2385
    %v2585 = vunpack.c.l.b16 %v2386
    %v2586 = vunpack.c.l.b16 %v2387
    %v2587 = vunpack.c.l.b16 %v2388
    %v2588 = vunpack.c.l.b16 %v2389
    %v2589 = vunpack.c.l.b16 %v2390
    %v2590 = vunpack.c.l.b16 %v2391
    %v2591 = vunpack.c.l.b16 %v2392
    %v2592 = vunpack.c.l.b16 %v2393
    %v2593 = vunpack.c.l.b16 %v2394
    %v2594 = vunpack.c.l.b16 %v2395
    %v2595 = vunpack.c.l.b16 %v2396
    %v2596 = vunpack.c.l.b16 %v2397
    %v2597 = vunpack.c.l.b16 %v2398
    %v2598 = vunpack.c.l.b16 %v2399
    %v2599 = vunpack.c.l.b16 %v2400
    %v2600 = vunpack.c.l.b16 %v2401
    %v2601 = vunpack.c.l.b16 %v2402
    %v2602 = vunpack.c.l.b16 %v2403
    %v2603 = vunpack.c.l.b16 %v2404
    %v2604 = vunpack.c.l.b16 %v2405
    %v2605 = vunpack.c.l.b16 %v2406
    %v2606 = vunpack.c.l.b16 %v2407
    %v2607 = vunpack.c.l.b16 %v2408
    %v2608 = vunpack.c.l.b16 %v2409
    %v2609 = vunpack.c.l.b16 %v2410
    %v2610 = vunpack.c.l.b16 %v2411
    %v2611 = vunpack.c.l.b16 %v2412
    %v2612 = vunpack.c.l.b16 %v2413
    %v2613 = vpack.c.b16 %v2518, %v2517
    %v2614 = vpack.c.b16 %v2520, %v2519
    %v2615 = vpack.c.b16 %v2522, %v2521
    %v2616 = vpack.c.b16 %v2524, %v2523
    %v2617 = vpack.c.b16 %v2526, %v2525
    %v2618 = vpack.c.b16 %v2528, %v2527
    %v2619 = vpack.c.b16 %v2530, %v2529
    %v2620 = vpack.c.b16 %v2532, %v2531
    %v2621 = vpack.c.b16 %v2534, %v2533
    %v2622 = vpack.c.b16 %v2536, %v2535
    %v2623 = vpack.c.b16 %v2538, %v2537
    %v2624 = vpack.c.b16 %v2540, %v2539
    %v2625 = vpack.c.b16 %v2542, %v2541
    %v2626 = vpack.c.b16 %v2544, %v2543
    %v2627 = vpack.c.b16 %v2546, %v2545
    %v2628 = vpack.c.b16 %v2548, %v2547
    %v2629 = vpack.c.b16 %v2550, %v2549
    %v2630 = vpack.c.b16 %v2552, %v2551
    %v2631 = vpack.c.b16 %v2554, %v2553
    %v2632 = vpack.c.b16 %v2556, %v2555
    %v2633 = vpack.c.b16 %v2558, %v2557
    %v2634 = vpack.c.b16 %v2560, %v2559
    %v2635 = vpack.c.b16 %v2562, %v2561
    %v2636 = vpack.c.b16 %v2564, %v2563
    %v2637 = vpack.c.b16 %v2566, %v2565
    %v2638 = vpack.c.b16 %v2568, %v2567
    %v2639 = vpack.c.b16 %v2570, %v2569
    %v2640 = vpack.c.b16 %v2572, %v2571
    %v2641 = vpack.c.b16 %v2574, %v2573
    %v2642 = vpack.c.b16 %v2576, %v2575
    %v2643 = vpack.c.b16 %v2578, %v2577
    %v2644 = vpack.c.b16 %v2580, %v2579
    %v2645 = vpack.c.b16 %v2582, %v2581
    %v2646 = vpack.c.b16 %v2584, %v2583
    %v2647 = vpack.c.b16 %v2586, %v2585
    %v2648 = vpack.c.b16 %v2588, %v2587
    %v2649 = vpack.c.b16 %v2590, %v2589
    %v2650 = vpack.c.b16 %v2592, %v2591
    %v2651 = vpack.c.b16 %v2594, %v2593
    %v2652 = vpack.c.b16 %v2596, %v2595
    %v2653 = vpack.c.b16 %v2598, %v2597
    %v2654 = vpack.c.b16 %v2600, %v2599
    %v2655 = vpack.c.b16 %v2602, %v2601
    %v2656 = vpack.c.b16 %v2604, %v2603
    %v2657 = vpack.c.b16 %v2606, %v2605
    %v2658 = vpack.c.b16 %v2608, %v2607
    %v2659 = vpack.c.b16 %v2610, %v2609
    %v2660 = vpack.c.b16 %v2612, %v2611
    %2709 = vmatprep.subr.bf16.mxu0 0
    %2710 = vmatpush1.bf16.msra.mxu0 %v2620
    %2711 = vmatprep.subr.bf16.mxu0 0
    %2712 = vmatpush1.bf16.msra.mxu0 %v2619
    %2713 = vmatprep.subr.bf16.mxu0 0
    %2714 = vmatpush1.bf16.msra.mxu0 %v2618
    %2715 = vmatprep.subr.bf16.mxu0 0
    %2716 = vmatpush1.bf16.msra.mxu0 %v2617
    %2717 = vmatprep.subr.bf16.mxu0 0
    %2718 = vmatpush1.bf16.msra.mxu0 %v2616
    %2719 = vmatprep.subr.bf16.mxu0 0
    %2720 = vmatpush1.bf16.msra.mxu0 %v2615
    %2721 = vmatprep.subr.bf16.mxu0 0
    %2722 = vmatpush1.bf16.msra.mxu0 %v2614
    %2723 = vmatprep.subr.bf16.mxu0 0
    %2724 = vmatpush1.bf16.msra.mxu0 %v2613
    %2725 = vmatprep.subr.bf16.mxu0 0
    %2726 = vmatpush2.bf16.msra.mxu0 %v2628
    %2727 = vmatprep.subr.bf16.mxu0 0
    %2728 = vmatpush2.bf16.msra.mxu0 %v2627
    %2729 = vmatprep.subr.bf16.mxu0 0
    %2730 = vmatpush2.bf16.msra.mxu0 %v2626
    %2731 = vmatprep.subr.bf16.mxu0 0
    %2732 = vmatpush2.bf16.msra.mxu0 %v2625
    %2733 = vmatprep.subr.bf16.mxu0 0
    %2734 = vmatpush2.bf16.msra.mxu0 %v2624
    %2735 = vmatprep.subr.bf16.mxu0 0
    %2736 = vmatpush2.bf16.msra.mxu0 %v2623
    %2737 = vmatprep.subr.bf16.mxu0 0
    %2738 = vmatpush2.bf16.msra.mxu0 %v2622
    %2739 = vmatprep.subr.bf16.mxu0 0
    %2740 = vmatpush2.bf16.msra.mxu0 %v2621
    %2741 = vmatprep.mubr.bf16.mxu0 %v2313
    %2742 = vmatmul.mubr.bf16.gmra.mxu0 %v2312
    %v2743 = vpop.f32.mrf.mxu0
    %v2744 = vadd.f32 %v2419, %v2743
    %v2745 = vpop.f32.mrf.mxu0
    %v2746 = vpop.f32.mrf.mxu0
    %v2747 = vadd.f32 %v2419, %v2746
    %v2748 = vpop.f32.mrf.mxu0
    %2749 = vdwg.mxu0
    %2750 = vmatprep.subr.bf16.mxu0 0
    %2751 = vmatpush1.bf16.msra.mxu0 %v2636
    %2752 = vmatprep.subr.bf16.mxu0 0
    %2753 = vmatpush1.bf16.msra.mxu0 %v2635
    %2754 = vmatprep.subr.bf16.mxu0 0
    %2755 = vmatpush1.bf16.msra.mxu0 %v2634
    %2756 = vmatprep.subr.bf16.mxu0 0
    %2757 = vmatpush1.bf16.msra.mxu0 %v2633
    %2758 = vmatprep.subr.bf16.mxu0 0
    %2759 = vmatpush1.bf16.msra.mxu0 %v2632
    %2760 = vmatprep.subr.bf16.mxu0 0
    %2761 = vmatpush1.bf16.msra.mxu0 %v2631
    %2762 = vmatprep.subr.bf16.mxu0 0
    %2763 = vmatpush1.bf16.msra.mxu0 %v2630
    %2764 = vmatprep.subr.bf16.mxu0 0
    %2765 = vmatpush1.bf16.msra.mxu0 %v2629
    %2766 = vmatprep.subr.bf16.mxu0 0
    %2767 = vmatpush2.bf16.msra.mxu0 %v2644
    %2768 = vmatprep.subr.bf16.mxu0 0
    %2769 = vmatpush2.bf16.msra.mxu0 %v2643
    %2770 = vmatprep.subr.bf16.mxu0 0
    %2771 = vmatpush2.bf16.msra.mxu0 %v2642
    %2772 = vmatprep.subr.bf16.mxu0 0
    %2773 = vmatpush2.bf16.msra.mxu0 %v2641
    %2774 = vmatprep.subr.bf16.mxu0 0
    %2775 = vmatpush2.bf16.msra.mxu0 %v2640
    %2776 = vmatprep.subr.bf16.mxu0 0
    %2777 = vmatpush2.bf16.msra.mxu0 %v2639
    %2778 = vmatprep.subr.bf16.mxu0 0
    %2779 = vmatpush2.bf16.msra.mxu0 %v2638
    %2780 = vmatprep.subr.bf16.mxu0 0
    %2781 = vmatpush2.bf16.msra.mxu0 %v2637
    %2782 = vmatprep.mubr.bf16.mxu0 %v2315
    %2783 = vmatmul.mubr.bf16.gmra.mxu0 %v2314
    %v2784 = vpop.f32.mrf.mxu0
    %v2785 = vadd.f32 %v2744, %v2784
    %v2786 = vpop.f32.mrf.mxu0
    %v2787 = vpop.f32.mrf.mxu0
    %v2788 = vadd.f32 %v2747, %v2787
    %v2789 = vpop.f32.mrf.mxu0
    %2790 = vdwg.mxu0
    %2791 = vmatprep.subr.bf16.mxu0 0
    %2792 = vmatpush1.bf16.msra.mxu0 %v2652
    %2793 = vmatprep.subr.bf16.mxu0 0
    %2794 = vmatpush1.bf16.msra.mxu0 %v2651
    %2795 = vmatprep.subr.bf16.mxu0 0
    %2796 = vmatpush1.bf16.msra.mxu0 %v2650
    %2797 = vmatprep.subr.bf16.mxu0 0
    %2798 = vmatpush1.bf16.msra.mxu0 %v2649
    %2799 = vmatprep.subr.bf16.mxu0 0
    %2800 = vmatpush1.bf16.msra.mxu0 %v2648
    %2801 = vmatprep.subr.bf16.mxu0 0
    %2802 = vmatpush1.bf16.msra.mxu0 %v2647
    %2803 = vmatprep.subr.bf16.mxu0 0
    %2804 = vmatpush1.bf16.msra.mxu0 %v2646
    %2805 = vmatprep.subr.bf16.mxu0 0
    %2806 = vmatpush1.bf16.msra.mxu0 %v2645
    %2807 = vmatprep.subr.bf16.mxu0 0
    %2808 = vmatpush2.bf16.msra.mxu0 %v2660
    %2809 = vmatprep.subr.bf16.mxu0 0
    %2810 = vmatpush2.bf16.msra.mxu0 %v2659
    %2811 = vmatprep.subr.bf16.mxu0 0
    %2812 = vmatpush2.bf16.msra.mxu0 %v2658
    %2813 = vmatprep.subr.bf16.mxu0 0
    %2814 = vmatpush2.bf16.msra.mxu0 %v2657
    %2815 = vmatprep.subr.bf16.mxu0 0
    %2816 = vmatpush2.bf16.msra.mxu0 %v2656
    %2817 = vmatprep.subr.bf16.mxu0 0
    %2818 = vmatpush2.bf16.msra.mxu0 %v2655
    %2819 = vmatprep.subr.bf16.mxu0 0
    %2820 = vmatpush2.bf16.msra.mxu0 %v2654
    %2821 = vmatprep.subr.bf16.mxu0 0
    %2822 = vmatpush2.bf16.msra.mxu0 %v2653
    %2823 = vmatprep.mubr.bf16.mxu0 %v2317
    %2824 = vmatmul.mubr.bf16.gmra.mxu0 %v2316
    %v2825 = vpop.f32.mrf.mxu0
    %v2826 = vadd.f32 %v2785, %v2825
    %v2827 = vpop.f32.mrf.mxu0
    %v2828 = vpop.f32.mrf.mxu0
    %v2829 = vadd.f32 %v2788, %v2828
    %v2830 = vpop.f32.mrf.mxu0
    %2831 = vdwg.mxu0
    %v2832 = vtanh.pop %v2826
    %v2833 = vtanh.pop %v2829
    %v2834 = vld [vmem:[#allocation11] sm:$0xff]
    %v2835 = vld [vmem:[#allocation11 + $0x8] sm:$0xff]
    %v2836 = vld [vmem:[#allocation11 + $0x10] sm:$0xff]
    %v2837 = vld [vmem:[#allocation11 + $0x18] sm:$0xff]
    %v2838 = vld [vmem:[#allocation11 + $0x20] sm:$0xff]
    %v2839 = vld [vmem:[#allocation11 + $0x28] sm:$0xff]
    %v2840 = vld [vmem:[#allocation11 + $0x30] sm:$0xff]
    %v2841 = vld [vmem:[#allocation11 + $0x38] sm:$0xff]
    %v2842 = vld [vmem:[#allocation11 + $0x40] sm:$0xff]
    %v2843 = vld [vmem:[#allocation11 + $0x48] sm:$0xff]
    %v2844 = vld [vmem:[#allocation11 + $0x50] sm:$0xff]
    %v2845 = vld [vmem:[#allocation11 + $0x58] sm:$0xff]
    %v2846 = vld [vmem:[#allocation11 + $0x60] sm:$0xff]
    %v2847 = vld [vmem:[#allocation11 + $0x68] sm:$0xff]
    %v2848 = vld [vmem:[#allocation11 + $0x70] sm:$0xff]
    %v2849 = vld [vmem:[#allocation11 + $0x78] sm:$0xff]
    %v2850 = vld [vmem:[#allocation13] sm:$0x1]
    %v2852 = vlaneseq
    %v2853 = vshrl.u32 %v2852, 7
    %v2854 = vsub.s32 0, %v2853
    %v2855 = vrot.slane %v2850, %v2854
    %2857 = vmatprep.subr.mxu0 0.0
    %2858 = vmatpush1.msra.mxu0 %v2849
    %2859 = vmatprep.subr.mxu0 0.0
    %2860 = vmatpush1.msra.mxu0 %v2848
    %2861 = vmatprep.subr.mxu0 0.0
    %2862 = vmatpush1.msra.mxu0 %v2847
    %2863 = vmatprep.subr.mxu0 0.0
    %2864 = vmatpush1.msra.mxu0 %v2846
    %2865 = vmatprep.subr.mxu0 0.0
    %2866 = vmatpush1.msra.mxu0 %v2845
    %2867 = vmatprep.subr.mxu0 0.0
    %2868 = vmatpush1.msra.mxu0 %v2844
    %2869 = vmatprep.subr.mxu0 0.0
    %2870 = vmatpush1.msra.mxu0 %v2843
    %2871 = vmatprep.subr.mxu0 0.0
    %2872 = vmatpush1.msra.mxu0 %v2842
    %2873 = vmatprep.subr.mxu0 0.0
    %2874 = vmatpush1.msra.mxu0 %v2841
    %2875 = vmatprep.subr.mxu0 0.0
    %2876 = vmatpush1.msra.mxu0 %v2840
    %2877 = vmatprep.subr.mxu0 0.0
    %2878 = vmatpush1.msra.mxu0 %v2839
    %2879 = vmatprep.subr.mxu0 0.0
    %2880 = vmatpush1.msra.mxu0 %v2838
    %2881 = vmatprep.subr.mxu0 0.0
    %2882 = vmatpush1.msra.mxu0 %v2837
    %2883 = vmatprep.subr.mxu0 0.0
    %2884 = vmatpush1.msra.mxu0 %v2836
    %2885 = vmatprep.subr.mxu0 0.0
    %2886 = vmatpush1.msra.mxu0 %v2835
    %2887 = vmatprep.subr.mxu0 0.0
    %2888 = vmatpush1.msra.mxu0 %v2834
    %2889 = vmatprep.subr.mxu0 0.0
    %2890 = vmatpush2.msra.mxu0 0.0
    %2891 = vmatprep.subr.mxu0 0.0
    %2892 = vmatpush2.msra.mxu0 0.0
    %2893 = vmatprep.subr.mxu0 0.0
    %2894 = vmatpush2.msra.mxu0 0.0
    %2895 = vmatprep.subr.mxu0 0.0
    %2896 = vmatpush2.msra.mxu0 0.0
    %2897 = vmatprep.subr.mxu0 0.0
    %2898 = vmatpush2.msra.mxu0 0.0
    %2899 = vmatprep.subr.mxu0 0.0
    %2900 = vmatpush2.msra.mxu0 0.0
    %2901 = vmatprep.subr.mxu0 0.0
    %2902 = vmatpush2.msra.mxu0 0.0
    %2903 = vmatprep.subr.mxu0 0.0
    %2904 = vmatpush2.msra.mxu0 0.0
    %2905 = vmatprep.subr.mxu0 0.0
    %2906 = vmatpush2.msra.mxu0 0.0
    %2907 = vmatprep.subr.mxu0 0.0
    %2908 = vmatpush2.msra.mxu0 0.0
    %2909 = vmatprep.subr.mxu0 0.0
    %2910 = vmatpush2.msra.mxu0 0.0
    %2911 = vmatprep.subr.mxu0 0.0
    %2912 = vmatpush2.msra.mxu0 0.0
    %2913 = vmatprep.subr.mxu0 0.0
    %2914 = vmatpush2.msra.mxu0 0.0
    %2915 = vmatprep.subr.mxu0 0.0
    %2916 = vmatpush2.msra.mxu0 0.0
    %2917 = vmatprep.subr.mxu0 0.0
    %2918 = vmatpush2.msra.mxu0 0.0
    %2919 = vmatprep.subr.mxu0 0.0
    %2920 = vmatpush2.msra.mxu0 0.0
    %2921 = vmatprep.mubr.f32.mxu0 0.0
    %2922 = vmatmul.mubr.f32.gmra.mxu0 %v2832
    %v2923 = vpop.f32.mrf.mxu0
    %v2924 = vadd.f32 %v2855, %v2923
    %v2925 = vpop.f32.mrf.mxu0
    %2926 = vmatprep.mubr.f32.mxu0 0.0
    %2927 = vmatmul.mubr.f32.gmra.mxu0 %v2833
    %v2928 = vpop.f32.mrf.mxu0
    %v2929 = vadd.f32 %v2855, %v2928
    %v2930 = vpop.f32.mrf.mxu0
    %2931 = vdwg.mxu0
    %2932 = vst [vmem:[#allocation14] sm:$0xff] %v2924
    %2933 = vst [vmem:[#allocation14 + $0x8] sm:$0xff] %v2929
    // Predicated region
    $region58: #{tpu_custom_call.1} parent=1 // pred_check
      _
    $region59: #{tpu_custom_call.1} parent=1 // pred_check_branch
      %2935 = sbr.rel (0) target = $region61
    $region60: #{tpu_custom_call.1} parent=1 // pred_region
      %s2937 = ssub.s32 256, 256
      %2938 = vsyncadd [#allocation4], %s2937
      %s2939 = sshll.u32 [#allocation14], 4
      %s2940 = int_to_ptr.vmem [resolvable:$true] %s2939
      %2945 = dma.vmem_to_hbm [thread:$0]  %s2940, 256, %s7, [#allocation4], 128, 128, 8
    $region61: #{tpu_custom_call.1} parent=1 // pred_fallthru
      _
    // Predicated region
    $region62: #{tpu_custom_call.1} parent=1 // pred_check
      _
    $region63: #{tpu_custom_call.1} parent=1 // pred_check_branch
      %2947 = sbr.rel (0) target = $region65
    $region64: #{tpu_custom_call.1} parent=1 // pred_region
      %2948 = dma.done [#allocation4], 256
    $region65: #{tpu_custom_call.1} parent=1 // pred_fallthru
      _
    %2949 = vsyncpa [#allocation3], 1
    %2950 = vsyncpa [#allocation6], 1
    %2951 = vsyncpa [#allocation9], 1
    %2952 = vsyncpa [#allocation12], 1
    %2953 = vsyncpa [#allocation4], 1

</llo_original>
